<compile_context>
chip_gen: v5e
topology: v5e:2x2
jax: 0.10.0
libtpu: 0.0.40
codegen_flags: <defaults>
</compile_context>

<pallas_src>
import functools
import math

import jax
import jax.numpy as jnp
from jax.experimental import pallas as pl
from jax.experimental.pallas import tpu as pltpu

MASK = -1.0
EPS = 1e-8  # l2norm epsilon: x / (sqrt(sum(x^2)) + eps), as in vse_infty


def _round_up(x, m):
    return ((x + m - 1) // m) * m


# ---------------------------------------------------------------------------
# Plain-JAX glue
# ---------------------------------------------------------------------------
def positional_encoding_1d(d_model, length):
    if d_model % 2 != 0:
        raise ValueError("d_model must be even")
    position = jnp.arange(length, dtype=jnp.float32)[:, None]
    div_term = jnp.exp(
        jnp.arange(0, d_model, 2, dtype=jnp.float32) * -(math.log(10000.0) / d_model)
    )
    pe_sin = jnp.sin(position * div_term)
    pe_cos = jnp.cos(position * div_term)
    # interleave: even cols = sin, odd cols = cos
    return jnp.stack([pe_sin, pe_cos], axis=-1).reshape(length, d_model)


def reverse_within_length(x, lens):
    """x: (B, T, F).  For each b: x[b, L_b-1-t] for t < L_b else 0 (packed-GRU emulation)."""
    B, T, F = x.shape
    t_idx = jnp.arange(T, dtype=lens.dtype)[None, :]
    rev_idx = lens[:, None] - 1 - t_idx                       # (B, T)
    valid = rev_idx >= 0
    rev_idx = jnp.clip(rev_idx, 0, T - 1)
    gathered = jnp.take_along_axis(
        x, jnp.broadcast_to(rev_idx[:, :, None], x.shape), axis=1
    )
    return jnp.where(valid[:, :, None], gathered, 0.0)


# ---------------------------------------------------------------------------
# Kernel 1: fused bidirectional GRU recurrence (time-major, T-chunked grid)
#   xg : (T, B, 6H)  precomputed  x@Wi + bi, gate order [r_f r_b z_f z_b n_f n_b]
#   wh : (2H, 6H)    block-diagonal recurrent weights, same gate order, rows [h_f ; h_b]
#   bh : (1, 6H)
#   out: (T, B, 2H)  hidden states [h_f | h_b]
# ---------------------------------------------------------------------------
def gru_kernel(xg_ref, wh_ref, bh_ref, out_ref, h_ref, *, hidden):
    H2 = 2 * hidden

    @pl.when(pl.program_id(0) == 0)
    def _():
        h_ref[...] = jnp.zeros_like(h_ref)

    Tt = xg_ref.shape[0]
    wh = wh_ref[...]          # hoisted: resident across the chunk
    bh = bh_ref[...]

    def step(t, carry):
        h = h_ref[...]                                                     # (B, 2H)
        hg = jnp.dot(h, wh, preferred_element_type=jnp.float32) + bh       # (B, 6H) one matmul
        xg = xg_ref[t]                                                     # (B, 6H)
        r = jax.nn.sigmoid(xg[:, :H2] + hg[:, :H2])
        z = jax.nn.sigmoid(xg[:, H2:2 * H2] + hg[:, H2:2 * H2])
        n = jnp.tanh(xg[:, 2 * H2:] + r * hg[:, 2 * H2:])
        h_new = (1.0 - z) * n + z * h
        h_ref[...] = h_new
        out_ref[t] = h_new
        return carry

    jax.lax.fori_loop(0, Tt, step, 0)


def run_gru(xg, wh_bd, bh_all, hidden, t_chunk=128):
    T, B, G = xg.shape
    H2 = 2 * hidden
    Tt = min(t_chunk, T)
    T_pad = _round_up(T, Tt)
    if T_pad != T:
        xg = jnp.pad(xg, ((0, T_pad - T), (0, 0), (0, 0)))
    out = pl.pallas_call(
        functools.partial(gru_kernel, hidden=hidden),
        out_shape=jax.ShapeDtypeStruct((T_pad, B, H2), jnp.float32),
        grid=(T_pad // Tt,),
        in_specs=[
            pl.BlockSpec((Tt, B, G), lambda i: (i, 0, 0)),
            pl.BlockSpec((H2, G), lambda i: (0, 0)),
            pl.BlockSpec((1, G), lambda i: (0, 0)),
        ],
        out_specs=pl.BlockSpec((Tt, B, H2), lambda i: (i, 0, 0)),
        scratch_shapes=[pltpu.VMEM((B, H2), jnp.float32)],
        compiler_params=pltpu.CompilerParams(dimension_semantics=("arbitrary",)),
    )(xg, wh_bd, bh_all)
    return out[:T]


def _build_gru_operands(pes, pes_rev, params):
    """Hoist x@Wi out of the recurrence and pack both directions into fused operands."""
    H = params["wh_f"].shape[0]
    x_f = jnp.transpose(pes, (1, 0, 2))                                    # (T, B, d_pe)
    x_b = jnp.transpose(pes_rev, (1, 0, 2))
    gx_f = jnp.einsum("tbp,ph->tbh", x_f, params["wi_f"]) + params["bi_f"]  # (T, B, 3H)
    gx_b = jnp.einsum("tbp,ph->tbh", x_b, params["wi_b"]) + params["bi_b"]

    def interleave(a, b):   # -> gate order [r_f r_b z_f z_b n_f n_b]
        return jnp.concatenate(
            [a[..., 0:H], b[..., 0:H],
             a[..., H:2 * H], b[..., H:2 * H],
             a[..., 2 * H:], b[..., 2 * H:]], axis=-1)

    xg = interleave(gx_f, gx_b)                                            # (T, B, 6H)

    zero = jnp.zeros((H, H), jnp.float32)

    def blk(g):
        wf = params["wh_f"][:, g * H:(g + 1) * H]
        wb = params["wh_b"][:, g * H:(g + 1) * H]
        top = jnp.concatenate([wf, zero], axis=1)
        bot = jnp.concatenate([zero, wb], axis=1)
        return jnp.concatenate([top, bot], axis=0)                         # (2H, 2H)

    wh_bd = jnp.concatenate([blk(0), blk(1), blk(2)], axis=1)              # (2H, 6H)

    bf, bb = params["bh_f"], params["bh_b"]
    bh = jnp.concatenate(
        [bf[0:H], bb[0:H], bf[H:2 * H], bb[H:2 * H], bf[2 * H:], bb[2 * H:]]
    )[None, :]                                                             # (1, 6H)
    return xg, wh_bd, bh


# ---------------------------------------------------------------------------
# Kernel 2: GPO scoring + softmax pooling + l2norm, tiled over a batch of captions
# ---------------------------------------------------------------------------
def pool_kernel(emb_ref, w_ref, mask_ref, feat_ref, out_ref):
    emb = emb_ref[...]                                                     # (Bt, T, H)
    w = w_ref[...]                                                         # (1, H)
    scores = jnp.sum(emb * w[None, :, :], axis=-1, keepdims=True)          # (Bt, T, 1)
    m = mask_ref[...]                                                      # (Bt, T, 1)
    scores = jnp.where(m > 0, scores, -10000.0) / 0.1
    smax = jnp.max(scores, axis=1, keepdims=True)
    e = jnp.exp(scores - smax)
    denom = jnp.sum(e, axis=1, keepdims=True)
    wts = e * pl.reciprocal(denom, approx=True)                            # softmax over T
    pooled = jnp.sum(feat_ref[...] * wts, axis=1)                          # (Bt, Dp)
    ss = jnp.sum(pooled * pooled, axis=-1, keepdims=True)
    inv = pl.reciprocal(jnp.sqrt(ss) + EPS, approx=True)
    out_ref[...] = pooled * inv                                            # l2-normed


def run_pool(out_emb, lin_w, mask3, sorted_feats, b_tile=8, lane=128):
    B, T, H = out_emb.shape
    D = sorted_feats.shape[2]
    Bp = _round_up(B, b_tile)
    Dp = _round_up(D, lane)                      # lane-dense output stores
    emb_p = jnp.pad(out_emb, ((0, Bp - B), (0, 0), (0, 0)))
    mask_p = jnp.pad(mask3, ((0, Bp - B), (0, 0), (0, 0)))
    feats_p = jnp.pad(sorted_feats, ((0, Bp - B), (0, 0), (0, Dp - D)))
    out = pl.pallas_call(
        pool_kernel,
        out_shape=jax.ShapeDtypeStruct((Bp, Dp), jnp.float32),
        grid=(Bp // b_tile,),
        in_specs=[
            pl.BlockSpec((b_tile, T, H), lambda b: (b, 0, 0)),
            pl.BlockSpec((1, H), lambda b: (0, 0)),
            pl.BlockSpec((b_tile, T, 1), lambda b: (b, 0, 0)),
            pl.BlockSpec((b_tile, T, Dp), lambda b: (b, 0, 0)),
        ],
        out_specs=pl.BlockSpec((b_tile, Dp), lambda b: (b, 0)),
        compiler_params=pltpu.CompilerParams(dimension_semantics=("parallel",)),
    )(emb_p, lin_w, mask_p, feats_p)
    return out[:B, :D]


# ---------------------------------------------------------------------------
# Kernel 3: per-region l2norm + cosine sims + mask + max over regions,
#           tiled over a batch of images, single (Bt*K, D)@(D, Cp) matmul per step
# ---------------------------------------------------------------------------
def sims_kernel(img_ref, mask_ref, caps_ref, out_ref, *, regions, b_tile):
    x = img_ref[...]                                                       # (Bt*K, D)
    ss = jnp.sum(x * x, axis=-1, keepdims=True)
    xn = x * pl.reciprocal(jnp.sqrt(ss) + EPS, approx=True)                # region l2norm
    s = jnp.dot(xn, caps_ref[...], preferred_element_type=jnp.float32)     # (Bt*K, Cp)
    s = jnp.where(mask_ref[...] > 0, s, MASK)
    rows = [jnp.max(s[b * regions:(b + 1) * regions], axis=0, keepdims=True)
            for b in range(b_tile)]                                        # max over regions
    out_ref[...] = jnp.concatenate(rows, axis=0)                           # (Bt, Cp)


def run_sims(imgs_emb, img_mask, caps_pooled, b_tile=8, lane=128):
    B_i, K, D = imgs_emb.shape
    B_c = caps_pooled.shape[0]
    Bip = _round_up(B_i, b_tile)
    Cp = _round_up(B_c, lane)                    # lane-dense output stores
    imgs_p = jnp.pad(imgs_emb, ((0, Bip - B_i), (0, 0), (0, 0))).reshape(Bip * K, D)
    mask_p = jnp.pad(img_mask, ((0, Bip - B_i), (0, 0))).reshape(Bip * K, 1)
    capsT = jnp.pad(caps_pooled, ((0, Cp - B_c), (0, 0))).T                # (D, Cp), pre-transposed
    out = pl.pallas_call(
        functools.partial(sims_kernel, regions=K, b_tile=b_tile),
        out_shape=jax.ShapeDtypeStruct((Bip, Cp), jnp.float32),
        grid=(Bip // b_tile,),
        in_specs=[
            pl.BlockSpec((b_tile * K, D), lambda b: (b, 0)),
            pl.BlockSpec((b_tile * K, 1), lambda b: (b, 0)),
            pl.BlockSpec((D, Cp), lambda b: (0, 0)),
        ],
        out_specs=pl.BlockSpec((b_tile, Cp), lambda b: (b, 0)),
        compiler_params=pltpu.CompilerParams(dimension_semantics=("parallel",)),
    )(imgs_p, mask_p, capsT)
    return out[:B_i, :B_c]


# ---------------------------------------------------------------------------
# Full forward pass (DetectingRegion.forward) — fully jittable (no host syncs)
# ---------------------------------------------------------------------------
def detecting_region(imgs_emb, caps_emb, img_lens, cap_lens, params):
    B_i, K_i, D = imgs_emb.shape
    B_c, K_c, _ = caps_emb.shape
    H = params["wh_f"].shape[0]
    d_pe = params["wi_f"].shape[0]

    # ---- txt_gpo: GPO pooling of the caption features ----
    pe = positional_encoding_1d(d_pe, K_c)                                 # (K_c, d_pe)
    cap_mask = (jnp.arange(K_c)[None, :] < cap_lens[:, None]).astype(jnp.float32)  # (B_c, K_c)
    pes = pe[None] * cap_mask[:, :, None]                                  # masked_fill 0
    pes_rev = reverse_within_length(pes, cap_lens)                         # packed bwd-direction emulation

    xg, wh_bd, bh = _build_gru_operands(pes, pes_rev, params)
    out = run_gru(xg, wh_bd, bh, H)                                        # (K_c, B_c, 2H)
    out = jnp.transpose(out, (1, 0, 2))                                    # (B_c, K_c, 2H)
    out_fwd = out[..., :H]
    out_bwd = reverse_within_length(out[..., H:], cap_lens)
    out_emb = (out_fwd + out_bwd) / 2.0                                    # (B_c, K_c, H)

    # sorted caption features (descending per column within valid region)
    # TODO(synk): torch.sort along the sequence dim has no clean Pallas TPU equivalent;
    # the sort is plain JAX, its consumption (weighted pooling + l2norm) is in-kernel.
    m3 = cap_mask[:, :, None]
    feats = jnp.where(m3 > 0, caps_emb, -10000.0)
    sorted_feats = -jnp.sort(-feats, axis=1)
    sorted_feats = jnp.where(m3 > 0, sorted_feats, 0.0)

    caps_pooled = run_pool(out_emb, params["lin_w"], m3, sorted_feats)     # (B_c, D), l2-normed

    # ---- region / caption similarities ----
    img_mask = (jnp.arange(K_i)[None, :] < img_lens[:, None]).astype(jnp.float32)  # (B_i, K_i)
    sims = run_sims(imgs_emb, img_mask, caps_pooled)                       # (B_i, B_c)
    return sims


# ---------------------------------------------------------------------------
# Deterministic parameter init (GRU gate order r, z, n; weights stored (in, 3H))
# ---------------------------------------------------------------------------
def init_params(key, d_pe, d_hidden):
    ks = jax.random.split(key, 9)
    bound = 1.0 / math.sqrt(d_hidden)

    def u(k, shape):
        return jax.random.uniform(k, shape, jnp.float32, -bound, bound)

    return dict(
        wi_f=u(ks[0], (d_pe, 3 * d_hidden)),
        wh_f=u(ks[1], (d_hidden, 3 * d_hidden)),
        bi_f=u(ks[2], (3 * d_hidden,)),
        bh_f=u(ks[3], (3 * d_hidden,)),
        wi_b=u(ks[4], (d_pe, 3 * d_hidden)),
        wh_b=u(ks[5], (d_hidden, 3 * d_hidden)),
        bi_b=u(ks[6], (3 * d_hidden,)),
        bh_b=u(ks[7], (3 * d_hidden,)),
        lin_w=u(ks[8], (1, d_hidden)),   # nn.Linear(d_hidden, 1, bias=False).weight
    )


if __name__ == "__main__":
    key = jax.random.PRNGKey(0)
    d_pe, d_hidden, D = 32, 32, 32
    B_i, K_i = 2, 16
    B_c, K_c = 3, 12

    k1, k2, k3 = jax.random.split(key, 3)
    imgs_emb = jax.random.normal(k1, (B_i, K_i, D), jnp.float32)
    caps_emb = jax.random.normal(k2, (B_c, K_c, D), jnp.float32)
    img_lens = jnp.array([16, 10], dtype=jnp.int32)
    cap_lens = jnp.array([8, 5, 7], dtype=jnp.int32)

    params = init_params(k3, d_pe, d_hidden)

    fwd = jax.jit(detecting_region)
    sims = fwd(imgs_emb, caps_emb, img_lens, cap_lens, params)
    sims = jax.block_until_ready(sims)
    assert sims.shape == (B_i, B_c), sims.shape
    assert bool(jnp.all(jnp.isfinite(sims)))
    print("KERNEL_OK")
</pallas_src>

<mosaic_0001>
module attributes {stable_mosaic.version = 11 : i64} {
  func.func @gru_kernel(%arg0: i32, %arg1: memref<12x3x192xf32, #tpu.memory_space<vmem>>, %arg2: memref<64x192xf32, #tpu.memory_space<vmem>>, %arg3: memref<1x192xf32, #tpu.memory_space<vmem>>, %arg4: memref<12x3x64xf32, #tpu.memory_space<vmem>>, %arg5: memref<3x64xf32, #tpu.memory_space<vmem>>) attributes {dimension_semantics = [#tpu.dimension_semantics<arbitrary>], iteration_bounds = array<i64: 1>, scalar_prefetch = 0 : i64, scratch_operands = 1 : i64, tpu.core_type = #tpu.core_type<tc>, window_params = [{transform_indices = @transform_0, window_bounds = array<i64: 12, 3, 192>}, {pipeline_mode = #tpu.pipeline_mode<synchronous>, transform_indices = @transform_1, window_bounds = array<i64: 64, 192>}, {pipeline_mode = #tpu.pipeline_mode<synchronous>, transform_indices = @transform_2, window_bounds = array<i64: 1, 192>}, {transform_indices = @transform_3, window_bounds = array<i64: 12, 3, 64>}]} {
    %c0_i32 = arith.constant 0 : i32
    %0 = arith.cmpi eq, %arg0, %c0_i32 : i32
    %1 = arith.extui %0 : i1 to i32
    %c0_i32_0 = arith.constant 0 : i32
    %2 = arith.cmpi ne, %1, %c0_i32_0 : i32
    scf.if %2 {
      %cst = arith.constant 0.000000e+00 : f32
      %6 = vector.broadcast %cst : f32 to vector<3x64xf32>
      %c0_6 = arith.constant 0 : index
      %c0_7 = arith.constant 0 : index
      %7 = vector.load %arg5[%c0_6, %c0_7] : memref<3x64xf32, #tpu.memory_space<vmem>>, vector<3x64xf32>
      tpu.vector_store %arg5[%c0_6, %c0_7], %6 {strides = array<i32>} : memref<3x64xf32, #tpu.memory_space<vmem>>, vector<3x64xf32>,
    } else {
    }
    %c0 = arith.constant 0 : index
    %c0_1 = arith.constant 0 : index
    %3 = vector.load %arg2[%c0, %c0_1] : memref<64x192xf32, #tpu.memory_space<vmem>>, vector<64x192xf32>
    %c0_2 = arith.constant 0 : index
    %c0_3 = arith.constant 0 : index
    %4 = vector.load %arg3[%c0_2, %c0_3] : memref<1x192xf32, #tpu.memory_space<vmem>>, vector<1x192xf32>
    %c0_i32_4 = arith.constant 0 : i32
    %c12_i32 = arith.constant 12 : i32
    %5 = arith.addi %c0_i32_4, %c12_i32 : i32
    %c1_i32 = arith.constant 1 : i32
    scf.for %arg6 = %c0_i32_4 to %5 step %c1_i32  : i32 {
      %c0_6 = arith.constant 0 : index
      %c0_7 = arith.constant 0 : index
      %6 = vector.load %arg5[%c0_6, %c0_7] : memref<3x64xf32, #tpu.memory_space<vmem>>, vector<3x64xf32>
      %cst = arith.constant dense<0.000000e+00> : vector<3x192xf32>
      %7 = tpu.matmul %6, %3, %cst {dimension_numbers = #tpu.dot_dimension_numbers<[1], [0], [0], [1], [0, 0, 1, 1], [], []>} : vector<3x64xf32>, vector<64x192xf32>, vector<3x192xf32> -> vector<3x192xf32>
      %8 = vector.broadcast %4 : vector<1x192xf32> to vector<3x192xf32>
      %9 = arith.addf %7, %8 : vector<3x192xf32>
      %10 = arith.index_cast %arg6 : i32 to index
      %c0_8 = arith.constant 0 : index
      %c0_9 = arith.constant 0 : index
      %11 = vector.load %arg1[%10, %c0_8, %c0_9] : memref<12x3x192xf32, #tpu.memory_space<vmem>>, vector<1x3x192xf32>
      %12 = vector.shape_cast %11 : vector<1x3x192xf32> to vector<3x192xf32>
      %13 = vector.extract_strided_slice %12 {offsets = [0, 0], sizes = [3, 64], strides = [1, 1]} : vector<3x192xf32> to vector<3x64xf32>
      %14 = vector.extract_strided_slice %9 {offsets = [0, 0], sizes = [3, 64], strides = [1, 1]} : vector<3x192xf32> to vector<3x64xf32>
      %15 = arith.addf %13, %14 : vector<3x64xf32>
      %16 = arith.negf %15 : vector<3x64xf32>
      %17 = math.exp %16 : vector<3x64xf32>
      %cst_10 = arith.constant 1.000000e+00 : f32
      %18 = vector.broadcast %cst_10 : f32 to vector<3x64xf32>
      %19 = arith.addf %18, %17 : vector<3x64xf32>
      %20 = arith.divf %18, %19 : vector<3x64xf32>
      %21 = vector.extract_strided_slice %12 {offsets = [0, 64], sizes = [3, 64], strides = [1, 1]} : vector<3x192xf32> to vector<3x64xf32>
      %22 = vector.extract_strided_slice %9 {offsets = [0, 64], sizes = [3, 64], strides = [1, 1]} : vector<3x192xf32> to vector<3x64xf32>
      %23 = arith.addf %21, %22 : vector<3x64xf32>
      %24 = arith.negf %23 : vector<3x64xf32>
      %25 = math.exp %24 : vector<3x64xf32>
      %cst_11 = arith.constant 1.000000e+00 : f32
      %26 = vector.broadcast %cst_11 : f32 to vector<3x64xf32>
      %27 = arith.addf %26, %25 : vector<3x64xf32>
      %28 = arith.divf %26, %27 : vector<3x64xf32>
      %29 = vector.extract_strided_slice %12 {offsets = [0, 128], sizes = [3, 64], strides = [1, 1]} : vector<3x192xf32> to vector<3x64xf32>
      %30 = vector.extract_strided_slice %9 {offsets = [0, 128], sizes = [3, 64], strides = [1, 1]} : vector<3x192xf32> to vector<3x64xf32>
      %31 = arith.mulf %20, %30 : vector<3x64xf32>
      %32 = arith.addf %29, %31 : vector<3x64xf32>
      %33 = math.tanh %32 : vector<3x64xf32>
      %cst_12 = arith.constant 1.000000e+00 : f32
      %34 = vector.broadcast %cst_12 : f32 to vector<3x64xf32>
      %35 = arith.subf %34, %28 : vector<3x64xf32>
      %36 = arith.mulf %35, %33 : vector<3x64xf32>
      %37 = arith.mulf %28, %6 : vector<3x64xf32>
      %38 = arith.addf %36, %37 : vector<3x64xf32>
      %c0_13 = arith.constant 0 : index
      %c0_14 = arith.constant 0 : index
      %39 = vector.load %arg5[%c0_13, %c0_14] : memref<3x64xf32, #tpu.memory_space<vmem>>, vector<3x64xf32>
      tpu.vector_store %arg5[%c0_13, %c0_14], %38 {strides = array<i32>} : memref<3x64xf32, #tpu.memory_space<vmem>>, vector<3x64xf32>,
      %40 = arith.index_cast %arg6 : i32 to index
      %c0_15 = arith.constant 0 : index
      %c0_16 = arith.constant 0 : index
      %41 = vector.load %arg4[%40, %c0_15, %c0_16] : memref<12x3x64xf32, #tpu.memory_space<vmem>>, vector<1x3x64xf32>
      %42 = vector.shape_cast %41 : vector<1x3x64xf32> to vector<3x64xf32>
      %43 = vector.shape_cast %38 : vector<3x64xf32> to vector<1x3x64xf32>
      tpu.vector_store %arg4[%40, %c0_15, %c0_16], %43 {strides = array<i32>} : memref<12x3x64xf32, #tpu.memory_space<vmem>>, vector<1x3x64xf32>,
    }
    %c12_i32_5 = arith.constant 12 : i32
    return
  }
  func.func @transform_0(%arg0: i32) -> (i32, i32, i32) {
    %c0_i32 = arith.constant 0 : i32
    %c0_i32_0 = arith.constant 0 : i32
    %c0_i32_1 = arith.constant 0 : i32
    return %arg0, %c0_i32, %c0_i32_0 : i32, i32, i32
  }
  func.func @transform_1(%arg0: i32) -> (i32, i32) {
    %c0_i32 = arith.constant 0 : i32
    %c0_i32_0 = arith.constant 0 : i32
    %c0_i32_1 = arith.constant 0 : i32
    return %c0_i32, %c0_i32_0 : i32, i32
  }
  func.func @transform_2(%arg0: i32) -> (i32, i32) {
    %c0_i32 = arith.constant 0 : i32
    %c0_i32_0 = arith.constant 0 : i32
    %c0_i32_1 = arith.constant 0 : i32
    return %c0_i32, %c0_i32_0 : i32, i32
  }
  func.func @transform_3(%arg0: i32) -> (i32, i32, i32) {
    %c0_i32 = arith.constant 0 : i32
    %c0_i32_0 = arith.constant 0 : i32
    %c0_i32_1 = arith.constant 0 : i32
    return %arg0, %c0_i32, %c0_i32_0 : i32, i32, i32
  }
}

module attributes {stable_mosaic.version = 11 : i64} {
  func.func @pool_kernel(%arg0: i32, %arg1: memref<8x12x32xf32, #tpu.memory_space<vmem>>, %arg2: memref<1x32xf32, #tpu.memory_space<vmem>>, %arg3: memref<8x12x1xf32, #tpu.memory_space<vmem>>, %arg4: memref<8x12x128xf32, #tpu.memory_space<vmem>>, %arg5: memref<8x128xf32, #tpu.memory_space<vmem>>) attributes {dimension_semantics = [#tpu.dimension_semantics<parallel>], iteration_bounds = array<i64: 1>, scalar_prefetch = 0 : i64, scratch_operands = 0 : i64, tpu.core_type = #tpu.core_type<tc>, window_params = [{transform_indices = @transform_0, window_bounds = array<i64: 8, 12, 32>}, {pipeline_mode = #tpu.pipeline_mode<synchronous>, transform_indices = @transform_1, window_bounds = array<i64: 1, 32>}, {transform_indices = @transform_2, window_bounds = array<i64: 8, 12, 1>}, {transform_indices = @transform_3, window_bounds = array<i64: 8, 12, 128>}, {transform_indices = @transform_4, window_bounds = array<i64: 8, 128>}]} {
    %c0 = arith.constant 0 : index
    %c0_0 = arith.constant 0 : index
    %c0_1 = arith.constant 0 : index
    %0 = vector.load %arg1[%c0, %c0_0, %c0_1] : memref<8x12x32xf32, #tpu.memory_space<vmem>>, vector<8x12x32xf32>
    %c0_2 = arith.constant 0 : index
    %c0_3 = arith.constant 0 : index
    %1 = vector.load %arg2[%c0_2, %c0_3] : memref<1x32xf32, #tpu.memory_space<vmem>>, vector<1x32xf32>
    %2 = vector.shape_cast %1 : vector<1x32xf32> to vector<1x1x32xf32>
    %3 = vector.broadcast %2 : vector<1x1x32xf32> to vector<8x12x32xf32>
    %4 = arith.mulf %0, %3 : vector<8x12x32xf32>
    %cst = arith.constant dense<0.000000e+00> : vector<8x12xf32>
    %5 = vector.multi_reduction <add>, %4, %cst [2] : vector<8x12x32xf32> to vector<8x12xf32>
    %6 = vector.shape_cast %5 : vector<8x12xf32> to vector<8x12x1xf32>
    %c0_4 = arith.constant 0 : index
    %c0_5 = arith.constant 0 : index
    %c0_6 = arith.constant 0 : index
    %7 = vector.load %arg3[%c0_4, %c0_5, %c0_6] : memref<8x12x1xf32, #tpu.memory_space<vmem>>, vector<8x12x1xf32>
    %cst_7 = arith.constant 0.000000e+00 : f32
    %8 = vector.broadcast %cst_7 : f32 to vector<8x12x1xf32>
    %9 = arith.cmpf ogt, %7, %8 : vector<8x12x1xf32>
    %cst_8 = arith.constant -1.000000e+04 : f32
    %10 = vector.broadcast %cst_8 : f32 to vector<8x12x1xf32>
    %11 = arith.select %9, %6, %10 : vector<8x12x1xi1>, vector<8x12x1xf32>
    %cst_9 = arith.constant 1.000000e-01 : f32
    %12 = vector.broadcast %cst_9 : f32 to vector<8x12x1xf32>
    %13 = arith.divf %11, %12 : vector<8x12x1xf32>
    %cst_10 = arith.constant dense<0xFF800000> : vector<8x1xf32>
    %14 = vector.multi_reduction <maximumf>, %13, %cst_10 [1] : vector<8x12x1xf32> to vector<8x1xf32>
    %15 = vector.shape_cast %14 : vector<8x1xf32> to vector<8x1x1xf32>
    %16 = vector.broadcast %15 : vector<8x1x1xf32> to vector<8x12x1xf32>
    %17 = arith.subf %13, %16 : vector<8x12x1xf32>
    %18 = math.exp %17 : vector<8x12x1xf32>
    %cst_11 = arith.constant dense<0.000000e+00> : vector<8x1xf32>
    %19 = vector.multi_reduction <add>, %18, %cst_11 [1] : vector<8x12x1xf32> to vector<8x1xf32>
    %20 = vector.shape_cast %19 : vector<8x1xf32> to vector<8x1x1xf32>
    %21 = tpu.reciprocal %20 {approx = true} : vector<8x1x1xf32> -> vector<8x1x1xf32>
    %22 = vector.broadcast %21 : vector<8x1x1xf32> to vector<8x12x1xf32>
    %23 = arith.mulf %18, %22 : vector<8x12x1xf32>
    %c0_12 = arith.constant 0 : index
    %c0_13 = arith.constant 0 : index
    %c0_14 = arith.constant 0 : index
    %24 = vector.load %arg4[%c0_12, %c0_13, %c0_14] : memref<8x12x128xf32, #tpu.memory_space<vmem>>, vector<8x12x128xf32>
    %25 = vector.broadcast %23 : vector<8x12x1xf32> to vector<8x12x128xf32>
    %26 = arith.mulf %24, %25 : vector<8x12x128xf32>
    %cst_15 = arith.constant dense<0.000000e+00> : vector<8x128xf32>
    %27 = vector.multi_reduction <add>, %26, %cst_15 [1] : vector<8x12x128xf32> to vector<8x128xf32>
    %28 = arith.mulf %27, %27 : vector<8x128xf32>
    %cst_16 = arith.constant dense<0.000000e+00> : vector<8xf32>
    %29 = vector.multi_reduction <add>, %28, %cst_16 [1] : vector<8x128xf32> to vector<8xf32>
    %30 = vector.shape_cast %29 : vector<8xf32> to vector<8x1xf32>
    %31 = math.sqrt %30 : vector<8x1xf32>
    %cst_17 = arith.constant 9.99999993E-9 : f32
    %32 = vector.broadcast %cst_17 : f32 to vector<8x1xf32>
    %33 = arith.addf %31, %32 : vector<8x1xf32>
    %34 = tpu.reciprocal %33 {approx = true} : vector<8x1xf32> -> vector<8x1xf32>
    %35 = vector.broadcast %34 : vector<8x1xf32> to vector<8x128xf32>
    %36 = arith.mulf %27, %35 : vector<8x128xf32>
    %c0_18 = arith.constant 0 : index
    %c0_19 = arith.constant 0 : index
    %37 = vector.load %arg5[%c0_18, %c0_19] : memref<8x128xf32, #tpu.memory_space<vmem>>, vector<8x128xf32>
    tpu.vector_store %arg5[%c0_18, %c0_19], %36 {strides = array<i32>} : memref<8x128xf32, #tpu.memory_space<vmem>>, vector<8x128xf32>,
    return
  }
  func.func @transform_0(%arg0: i32) -> (i32, i32, i32) {
    %c0_i32 = arith.constant 0 : i32
    %c0_i32_0 = arith.constant 0 : i32
    %c0_i32_1 = arith.constant 0 : i32
    return %arg0, %c0_i32, %c0_i32_0 : i32, i32, i32
  }
  func.func @transform_1(%arg0: i32) -> (i32, i32) {
    %c0_i32 = arith.constant 0 : i32
    %c0_i32_0 = arith.constant 0 : i32
    %c0_i32_1 = arith.constant 0 : i32
    return %c0_i32, %c0_i32_0 : i32, i32
  }
  func.func @transform_2(%arg0: i32) -> (i32, i32, i32) {
    %c0_i32 = arith.constant 0 : i32
    %c0_i32_0 = arith.constant 0 : i32
    %c0_i32_1 = arith.constant 0 : i32
    return %arg0, %c0_i32, %c0_i32_0 : i32, i32, i32
  }
  func.func @transform_3(%arg0: i32) -> (i32, i32, i32) {
    %c0_i32 = arith.constant 0 : i32
    %c0_i32_0 = arith.constant 0 : i32
    %c0_i32_1 = arith.constant 0 : i32
    return %arg0, %c0_i32, %c0_i32_0 : i32, i32, i32
  }
  func.func @transform_4(%arg0: i32) -> (i32, i32) {
    %c0_i32 = arith.constant 0 : i32
    %c0_i32_0 = arith.constant 0 : i32
    return %arg0, %c0_i32 : i32, i32
  }
}

module attributes {stable_mosaic.version = 11 : i64} {
  func.func @sims_kernel(%arg0: i32, %arg1: memref<128x32xf32, #tpu.memory_space<vmem>>, %arg2: memref<128x1xf32, #tpu.memory_space<vmem>>, %arg3: memref<32x128xf32, #tpu.memory_space<vmem>>, %arg4: memref<8x128xf32, #tpu.memory_space<vmem>>) attributes {dimension_semantics = [#tpu.dimension_semantics<parallel>], iteration_bounds = array<i64: 1>, scalar_prefetch = 0 : i64, scratch_operands = 0 : i64, tpu.core_type = #tpu.core_type<tc>, window_params = [{transform_indices = @transform_0, window_bounds = array<i64: 128, 32>}, {transform_indices = @transform_1, window_bounds = array<i64: 128, 1>}, {pipeline_mode = #tpu.pipeline_mode<synchronous>, transform_indices = @transform_2, window_bounds = array<i64: 32, 128>}, {transform_indices = @transform_3, window_bounds = array<i64: 8, 128>}]} {
    %c0 = arith.constant 0 : index
    %c0_0 = arith.constant 0 : index
    %0 = vector.load %arg1[%c0, %c0_0] : memref<128x32xf32, #tpu.memory_space<vmem>>, vector<128x32xf32>
    %1 = arith.mulf %0, %0 : vector<128x32xf32>
    %cst = arith.constant dense<0.000000e+00> : vector<128xf32>
    %2 = vector.multi_reduction <add>, %1, %cst [1] : vector<128x32xf32> to vector<128xf32>
    %3 = vector.shape_cast %2 : vector<128xf32> to vector<128x1xf32>
    %4 = math.sqrt %3 : vector<128x1xf32>
    %cst_1 = arith.constant 9.99999993E-9 : f32
    %5 = vector.broadcast %cst_1 : f32 to vector<128x1xf32>
    %6 = arith.addf %4, %5 : vector<128x1xf32>
    %7 = tpu.reciprocal %6 {approx = true} : vector<128x1xf32> -> vector<128x1xf32>
    %8 = vector.broadcast %7 : vector<128x1xf32> to vector<128x32xf32>
    %9 = arith.mulf %0, %8 : vector<128x32xf32>
    %c0_2 = arith.constant 0 : index
    %c0_3 = arith.constant 0 : index
    %10 = vector.load %arg3[%c0_2, %c0_3] : memref<32x128xf32, #tpu.memory_space<vmem>>, vector<32x128xf32>
    %cst_4 = arith.constant dense<0.000000e+00> : vector<128x128xf32>
    %11 = tpu.matmul %9, %10, %cst_4 {dimension_numbers = #tpu.dot_dimension_numbers<[1], [0], [0], [1], [0, 0, 1, 1], [], []>} : vector<128x32xf32>, vector<32x128xf32>, vector<128x128xf32> -> vector<128x128xf32>
    %c0_5 = arith.constant 0 : index
    %c0_6 = arith.constant 0 : index
    %12 = vector.load %arg2[%c0_5, %c0_6] : memref<128x1xf32, #tpu.memory_space<vmem>>, vector<128x1xf32>
    %cst_7 = arith.constant 0.000000e+00 : f32
    %13 = vector.broadcast %cst_7 : f32 to vector<128x1xf32>
    %14 = arith.cmpf ogt, %12, %13 : vector<128x1xf32>
    %cst_8 = arith.constant -1.000000e+00 : f32
    %15 = vector.shape_cast %14 : vector<128x1xi1> to vector<128x1xi1>
    %16 = vector.broadcast %15 : vector<128x1xi1> to vector<128x128xi1>
    %17 = vector.broadcast %cst_8 : f32 to vector<128x128xf32>
    %18 = arith.select %16, %11, %17 : vector<128x128xi1>, vector<128x128xf32>
    %19 = vector.extract_strided_slice %18 {offsets = [0, 0], sizes = [16, 128], strides = [1, 1]} : vector<128x128xf32> to vector<16x128xf32>
    %cst_9 = arith.constant dense<0xFF800000> : vector<128xf32>
    %20 = vector.multi_reduction <maximumf>, %19, %cst_9 [0] : vector<16x128xf32> to vector<128xf32>
    %21 = vector.shape_cast %20 : vector<128xf32> to vector<1x128xf32>
    %22 = vector.extract_strided_slice %18 {offsets = [16, 0], sizes = [16, 128], strides = [1, 1]} : vector<128x128xf32> to vector<16x128xf32>
    %cst_10 = arith.constant dense<0xFF800000> : vector<128xf32>
    %23 = vector.multi_reduction <maximumf>, %22, %cst_10 [0] : vector<16x128xf32> to vector<128xf32>
    %24 = vector.shape_cast %23 : vector<128xf32> to vector<1x128xf32>
    %25 = vector.extract_strided_slice %18 {offsets = [32, 0], sizes = [16, 128], strides = [1, 1]} : vector<128x128xf32> to vector<16x128xf32>
    %cst_11 = arith.constant dense<0xFF800000> : vector<128xf32>
    %26 = vector.multi_reduction <maximumf>, %25, %cst_11 [0] : vector<16x128xf32> to vector<128xf32>
    %27 = vector.shape_cast %26 : vector<128xf32> to vector<1x128xf32>
    %28 = vector.extract_strided_slice %18 {offsets = [48, 0], sizes = [16, 128], strides = [1, 1]} : vector<128x128xf32> to vector<16x128xf32>
    %cst_12 = arith.constant dense<0xFF800000> : vector<128xf32>
    %29 = vector.multi_reduction <maximumf>, %28, %cst_12 [0] : vector<16x128xf32> to vector<128xf32>
    %30 = vector.shape_cast %29 : vector<128xf32> to vector<1x128xf32>
    %31 = vector.extract_strided_slice %18 {offsets = [64, 0], sizes = [16, 128], strides = [1, 1]} : vector<128x128xf32> to vector<16x128xf32>
    %cst_13 = arith.constant dense<0xFF800000> : vector<128xf32>
    %32 = vector.multi_reduction <maximumf>, %31, %cst_13 [0] : vector<16x128xf32> to vector<128xf32>
    %33 = vector.shape_cast %32 : vector<128xf32> to vector<1x128xf32>
    %34 = vector.extract_strided_slice %18 {offsets = [80, 0], sizes = [16, 128], strides = [1, 1]} : vector<128x128xf32> to vector<16x128xf32>
    %cst_14 = arith.constant dense<0xFF800000> : vector<128xf32>
    %35 = vector.multi_reduction <maximumf>, %34, %cst_14 [0] : vector<16x128xf32> to vector<128xf32>
    %36 = vector.shape_cast %35 : vector<128xf32> to vector<1x128xf32>
    %37 = vector.extract_strided_slice %18 {offsets = [96, 0], sizes = [16, 128], strides = [1, 1]} : vector<128x128xf32> to vector<16x128xf32>
    %cst_15 = arith.constant dense<0xFF800000> : vector<128xf32>
    %38 = vector.multi_reduction <maximumf>, %37, %cst_15 [0] : vector<16x128xf32> to vector<128xf32>
    %39 = vector.shape_cast %38 : vector<128xf32> to vector<1x128xf32>
    %40 = vector.extract_strided_slice %18 {offsets = [112, 0], sizes = [16, 128], strides = [1, 1]} : vector<128x128xf32> to vector<16x128xf32>
    %cst_16 = arith.constant dense<0xFF800000> : vector<128xf32>
    %41 = vector.multi_reduction <maximumf>, %40, %cst_16 [0] : vector<16x128xf32> to vector<128xf32>
    %42 = vector.shape_cast %41 : vector<128xf32> to vector<1x128xf32>
    %43 = tpu.concatenate %21, %24, %27, %30, %33, %36, %39, %42 in 0 : vector<1x128xf32>, vector<1x128xf32>, vector<1x128xf32>, vector<1x128xf32>, vector<1x128xf32>, vector<1x128xf32>, vector<1x128xf32>, vector<1x128xf32> -> vector<8x128xf32>
    %c0_17 = arith.constant 0 : index
    %c0_18 = arith.constant 0 : index
    %44 = vector.load %arg4[%c0_17, %c0_18] : memref<8x128xf32, #tpu.memory_space<vmem>>, vector<8x128xf32>
    tpu.vector_store %arg4[%c0_17, %c0_18], %43 {strides = array<i32>} : memref<8x128xf32, #tpu.memory_space<vmem>>, vector<8x128xf32>,
    return
  }
  func.func @transform_0(%arg0: i32) -> (i32, i32) {
    %c0_i32 = arith.constant 0 : i32
    %c0_i32_0 = arith.constant 0 : i32
    return %arg0, %c0_i32 : i32, i32
  }
  func.func @transform_1(%arg0: i32) -> (i32, i32) {
    %c0_i32 = arith.constant 0 : i32
    %c0_i32_0 = arith.constant 0 : i32
    return %arg0, %c0_i32 : i32, i32
  }
  func.func @transform_2(%arg0: i32) -> (i32, i32) {
    %c0_i32 = arith.constant 0 : i32
    %c0_i32_0 = arith.constant 0 : i32
    %c0_i32_1 = arith.constant 0 : i32
    return %c0_i32, %c0_i32_0 : i32, i32
  }
  func.func @transform_3(%arg0: i32) -> (i32, i32) {
    %c0_i32 = arith.constant 0 : i32
    %c0_i32_0 = arith.constant 0 : i32
    return %arg0, %c0_i32 : i32, i32
  }
}

</mosaic_0001>

<llo_original>
// kernel: detecting_region.3
$region0: #{detecting_region.3}
  #allocation0 [shape = 'u32[]', space=smem, size = 0x4, offset = 0x4, fixed_abs, tag = 'smem constant byte address 0x4 - core index']
  #allocation1 [shape = 'u32[72,128]{1,0:T(1,128)}', space=vmem, size = 0x9000, scoped, tag = 'internal scratch']
  #allocation2 [shape = 'f32[3,64]{1,0:T(4,128)}', space=vmem, size = 0x800, scoped, tag = 'scratch operand']
  %s0 = inlined_call_operand.vmem [shape: f32[12,3,192], index: 0, kind: input, shape index: {}]
  %s1 = inlined_call_operand.vmem [shape: f32[64,192], index: 1, kind: input, shape index: {}]
  %s2 = inlined_call_operand.vmem [shape: f32[1,192], index: 2, kind: input, shape index: {}]
  %s3 = inlined_call_operand.vmem [shape: f32[12,3,64], index: 3, kind: output, shape index: {}]
  %s4 = sld [smem:[#allocation0]]
  $region33: #{detecting_region.3} parent=0
    _
  %s6 = ssub.s32 1, %s4
  %s7 = scalar_select 0, %s6, %s4
  // Predicated region
  $region2: #{detecting_region.3} parent=0 // pred_check
    _
  $region3: #{detecting_region.3} parent=0 // pred_check_branch
    %9 = sbr.rel (0) target = $region5
  $region4: #{detecting_region.3} parent=0 // pred_region
    _
  $region5: #{detecting_region.3} parent=0 // pred_fallthru
    _
  // Predicated region
  $region6: #{detecting_region.3} parent=0 // pred_check
    _
  $region7: #{detecting_region.3} parent=0 // pred_check_branch
    %11 = sbr.rel (0) target = $region9
  $region8: #{detecting_region.3} parent=0 // pred_region
    _
  $region9: #{detecting_region.3} parent=0 // pred_fallthru
    _
  // Predicated region
  $region10: #{detecting_region.3} parent=0 // pred_check
    _
  $region11: #{detecting_region.3} parent=0 // pred_check_branch
    %13 = sbr.rel (0) target = $region13
  $region12: #{detecting_region.3} parent=0 // pred_region
    _
  $region13: #{detecting_region.3} parent=0 // pred_fallthru
    _
  %p14 = scmp.eq.s32.totalorder 0, 0
  // Predicated region
  $region14: #{detecting_region.3} parent=0 // pred_check
    %p15 = pneg %p14
  $region15: #{detecting_region.3} parent=0 // pred_check_branch
    %17 = sbr.rel (%p15) target = $region17
  $region16: #{detecting_region.3} parent=0 // pred_region
    %vm18 = vcmask 518144
    %19 = vst.msk [vmem:[#allocation2] sm:$0x7] %vm18, 0.0
  $region17: #{detecting_region.3} parent=0 // pred_fallthru
    _
  %v20 = vld [vmem:[%s1] sm:$0xff]
  %v21 = vld [vmem:[%s1 + $0x8] sm:$0xff]
  %v22 = vld [vmem:[%s1 + $0x10] sm:$0xff]
  %v23 = vld [vmem:[%s1 + $0x18] sm:$0xff]
  %v24 = vld [vmem:[%s1 + $0x20] sm:$0xff]
  %v25 = vld [vmem:[%s1 + $0x28] sm:$0xff]
  %v26 = vld [vmem:[%s1 + $0x30] sm:$0xff]
  %v27 = vld [vmem:[%s1 + $0x38] sm:$0xff]
  %v28 = vld [vmem:[%s1 + $0x40] sm:$0xff]
  %v29 = vld [vmem:[%s1 + $0x48] sm:$0xff]
  %v30 = vld [vmem:[%s1 + $0x50] sm:$0xff]
  %v31 = vld [vmem:[%s1 + $0x58] sm:$0xff]
  %v32 = vld [vmem:[%s1 + $0x60] sm:$0xff]
  %v33 = vld [vmem:[%s1 + $0x68] sm:$0xff]
  %v34 = vld [vmem:[%s1 + $0x70] sm:$0xff]
  %v35 = vld [vmem:[%s1 + $0x78] sm:$0xff]
  %v36 = vld [vmem:[%s2] sm:$0x3]
  loop: start=0, step=1, limit=12
  $region18: #{detecting_region.3} parent=0 // loop_pre_header
    _
  $region19: #{detecting_region.3} parent=0 // loop_header
    %s38 = sphi 0, %s42
    %p39 = scmp.ge.s32.totalorder %s38, 12
  $region20: #{detecting_region.3} parent=0 // loop_header_branch
    %41 = sbr.rel (%p39) target = $region24
  $region21: #{detecting_region.3} parent=0 // loop_body
    %v43 = vld [vmem:[#allocation2] sm:$0x7]
    %v45 = vperm.slane %v36, 0
    %v46 = vperm.slane %v36, 1
    %vm49 = vcmask 523264
    %v51 = vsel %vm49, %v43, 0
    %53 = vmatpush.msra.mxu0 0.0
    %54 = vmatpush.msra.mxu0 0.0
    %55 = vmatpush.msra.mxu0 0.0
    %56 = vmatpush.msra.mxu0 0.0
    %57 = vmatpush.msra.mxu0 0.0
    %58 = vmatpush.msra.mxu0 0.0
    %59 = vmatpush.msra.mxu0 0.0
    %60 = vmatpush.msra.mxu0 0.0
    %61 = vmatpush.msra.mxu0 %v34
    %62 = vmatpush.msra.mxu0 %v32
    %63 = vmatpush.msra.mxu0 %v30
    %64 = vmatpush.msra.mxu0 %v28
    %65 = vmatpush.msra.mxu0 %v26
    %66 = vmatpush.msra.mxu0 %v24
    %67 = vmatpush.msra.mxu0 %v22
    %68 = vmatpush.msra.mxu0 %v20
    %69 = vmatmul.f32.gmra.mxu0 %v51
    %v70 = vpop.f32.mrf.mxu0
    %v71 = vadd.f32 %v45, %v70
    %72 = vdwg.mxu0
    %73 = vmatpush.msra.mxu0 0.0
    %74 = vmatpush.msra.mxu0 0.0
    %75 = vmatpush.msra.mxu0 0.0
    %76 = vmatpush.msra.mxu0 0.0
    %77 = vmatpush.msra.mxu0 0.0
    %78 = vmatpush.msra.mxu0 0.0
    %79 = vmatpush.msra.mxu0 0.0
    %80 = vmatpush.msra.mxu0 0.0
    %81 = vmatpush.msra.mxu0 %v35
    %82 = vmatpush.msra.mxu0 %v33
    %83 = vmatpush.msra.mxu0 %v31
    %84 = vmatpush.msra.mxu0 %v29
    %85 = vmatpush.msra.mxu0 %v27
    %86 = vmatpush.msra.mxu0 %v25
    %87 = vmatpush.msra.mxu0 %v23
    %88 = vmatpush.msra.mxu0 %v21
    %89 = vmatmul.f32.gmra.mxu0 %v51
    %v90 = vpop.f32.mrf.mxu0
    %v91 = vadd.f32 %v46, %v90
    %92 = vdwg.mxu0
    %s93 = smul.u32 %s38, 2
    %s94 = smul.addr %s93, 4
    %s95 = scalar_lea.vmem %s0, %s94
    %v96 = vld [vmem:[%s95] sm:$0x77]
    %v97 = vadd.f32 %v96, %v71
    %v98 = vxor.u32 %v97, 2147483648
    %v99 = vmul.f32 %v98, 1.442695
    %v100 = vpow.pop %v99
    %v101 = vadd.f32 %v100, 1.0
    %v102 = vrcp.pop %v101
    %v103 = vmul.f32 %v101, %v102
    %v104 = vsub.f32 1.0, %v103
    %v105 = vmul.f32 %v102, %v104
    %v106 = vadd.f32 %v102, %v105
    %vm107 = vweird.f32 %v101
    %vm108 = vweird.f32 %v102
    %vm109 = vmor %vm107, %vm108
    %v110 = vsel %vm109, %v102, %v106
    %v111 = vand.u32 2147483647, %v101
    %vm112 = vcmp.eq.f32.partialorder %v111, 8.507059e+37
    %v113 = vand.u32 %v101, 2147483648
    %v114 = vor.u32 1.1754944e-38, %v113
    %v115 = vsel %vm112, %v114, %v110
    %v116 = vmul.f32 1.0, %v115
    %v117 = vmul.f32 %v116, %v91
    %v119 = vrot.slane %v96, 4
    %v121 = vadd.f32 %v119, %v117
    %v122 = vtanh.pop %v121
    %v123 = vsub.f32 1.0, %v116
    %125 = vrot.lane.b32.xlu0 %v122, 64
    %v126 = vpop.permute.xlu0 %125
    %v128 = vmul.f32 %v123, %v126
    %129 = vrot.lane.b32.xlu0 %v43, 64
    %v130 = vpop.permute.xlu0 %129
    %v132 = vmul.f32 %v116, %v130
    %v133 = vadd.f32 %v128, %v132
    %135 = vst [vmem:[#allocation1] ss:$2 sm:$0xff] %v133
    %v136 = vld.sshfl [vmem:[#allocation1] sm:$0xff pattern:$0x75316420]
    %137 = vrot.lane.b32.xlu0 %v136, 64
    %v138 = vpop.permute.xlu0 %137
    %vm140 = vcmask 518144
    %141 = vst.msk [vmem:[#allocation2] sm:$0x7] %vm140, %v138
    %142 = vst [vmem:[#allocation1] ss:$2 sm:$0xff] %v133
    %v143 = vld.sshfl [vmem:[#allocation1] sm:$0xff pattern:$0x75316420]
    %144 = vrot.lane.b32.xlu0 %v143, 64
    %v145 = vpop.permute.xlu0 %144
    %s147 = smul.u32 %s38, 4
    %s148 = scalar_lea.vmem %s3, %s147
    %149 = vst.msk [vmem:[%s148] sm:$0x7] %vm140, %v145
  $region22: #{detecting_region.3} parent=0 // loop_footer
    %s42 = sadd.s32 1, %s38
  $region23: #{detecting_region.3} parent=0 // loop_footer_branch
    %37 = sbr.rel target = $region19
  $region24: #{detecting_region.3} parent=0 // loop_exit
    _
  // Predicated region
  $region25: #{detecting_region.3} parent=0 // pred_check
    _
  $region26: #{detecting_region.3} parent=0 // pred_check_branch
    %151 = sbr.rel (0) target = $region28
  $region27: #{detecting_region.3} parent=0 // pred_region
    _
  $region28: #{detecting_region.3} parent=0 // pred_fallthru
    _
  // Predicated region
  $region29: #{detecting_region.3} parent=0 // pred_check
    _
  $region30: #{detecting_region.3} parent=0 // pred_check_branch
    %153 = sbr.rel (0) target = $region32
  $region31: #{detecting_region.3} parent=0 // pred_region
    _
  $region32: #{detecting_region.3} parent=0 // pred_fallthru
    _

// kernel: detecting_region.4
$region0: #{detecting_region.4}
  #allocation0 [shape = 'u32[]', space=smem, size = 0x4, offset = 0x4, fixed_abs, tag = 'smem constant byte address 0x4 - core index']
  #allocation1 [shape = 'u32[72,128]{1,0:T(1,128)}', space=vmem, size = 0x9000, scoped, tag = 'internal scratch']
  %s0 = inlined_call_operand.vmem [shape: f32[8,12,32], index: 0, kind: input, shape index: {}]
  %s1 = inlined_call_operand.vmem [shape: f32[1,32], index: 1, kind: input, shape index: {}]
  %s2 = inlined_call_operand.vmem [shape: f32[8,12,1], index: 2, kind: input, shape index: {}]
  %s3 = inlined_call_operand.vmem [shape: f32[8,12,128], index: 3, kind: input, shape index: {}]
  %s4 = inlined_call_operand.vmem [shape: f32[8,128], index: 4, kind: output, shape index: {}]
  %s5 = sld [smem:[#allocation0]]
  $region26: #{detecting_region.4} parent=0
    _
  %s7 = ssub.s32 1, %s5
  %s8 = scalar_select 0, %s7, %s5
  // Predicated region
  $region2: #{detecting_region.4} parent=0 // pred_check
    _
  $region3: #{detecting_region.4} parent=0 // pred_check_branch
    %10 = sbr.rel (0) target = $region5
  $region4: #{detecting_region.4} parent=0 // pred_region
    _
  $region5: #{detecting_region.4} parent=0 // pred_fallthru
    _
  // Predicated region
  $region6: #{detecting_region.4} parent=0 // pred_check
    _
  $region7: #{detecting_region.4} parent=0 // pred_check_branch
    %12 = sbr.rel (0) target = $region9
  $region8: #{detecting_region.4} parent=0 // pred_region
    _
  $region9: #{detecting_region.4} parent=0 // pred_fallthru
    _
  // Predicated region
  $region10: #{detecting_region.4} parent=0 // pred_check
    _
  $region11: #{detecting_region.4} parent=0 // pred_check_branch
    %14 = sbr.rel (0) target = $region13
  $region12: #{detecting_region.4} parent=0 // pred_region
    _
  $region13: #{detecting_region.4} parent=0 // pred_fallthru
    _
  // Predicated region
  $region14: #{detecting_region.4} parent=0 // pred_check
    _
  $region15: #{detecting_region.4} parent=0 // pred_check_branch
    %16 = sbr.rel (0) target = $region17
  $region16: #{detecting_region.4} parent=0 // pred_region
    _
  $region17: #{detecting_region.4} parent=0 // pred_fallthru
    _
  %v17 = vld [vmem:[%s0] sm:$0xff]
  %v18 = vld [vmem:[%s0 + $0x8] sm:$0xf]
  %v19 = vld [vmem:[%s0 + $0x10] sm:$0xff]
  %v20 = vld [vmem:[%s0 + $0x18] sm:$0xf]
  %v21 = vld [vmem:[%s0 + $0x20] sm:$0xff]
  %v22 = vld [vmem:[%s0 + $0x28] sm:$0xf]
  %v23 = vld [vmem:[%s0 + $0x30] sm:$0xff]
  %v24 = vld [vmem:[%s0 + $0x38] sm:$0xf]
  %v25 = vld [vmem:[%s0 + $0x40] sm:$0xff]
  %v26 = vld [vmem:[%s0 + $0x48] sm:$0xf]
  %v27 = vld [vmem:[%s0 + $0x50] sm:$0xff]
  %v28 = vld [vmem:[%s0 + $0x58] sm:$0xf]
  %v29 = vld [vmem:[%s0 + $0x60] sm:$0xff]
  %v30 = vld [vmem:[%s0 + $0x68] sm:$0xf]
  %v31 = vld [vmem:[%s0 + $0x70] sm:$0xff]
  %v32 = vld [vmem:[%s0 + $0x78] sm:$0xf]
  %v33 = vld [vmem:[%s1] sm:$0x1]
  %v35 = vperm.slane %v33, 0
  %v37 = vmul.f32 %v17, %v35
  %v38 = vmul.f32 %v18, %v35
  %v39 = vmul.f32 %v19, %v35
  %v40 = vmul.f32 %v20, %v35
  %v41 = vmul.f32 %v21, %v35
  %v42 = vmul.f32 %v22, %v35
  %v43 = vmul.f32 %v23, %v35
  %v44 = vmul.f32 %v24, %v35
  %v45 = vmul.f32 %v25, %v35
  %v46 = vmul.f32 %v26, %v35
  %v47 = vmul.f32 %v27, %v35
  %v48 = vmul.f32 %v28, %v35
  %v49 = vmul.f32 %v29, %v35
  %v50 = vmul.f32 %v30, %v35
  %v51 = vmul.f32 %v31, %v35
  %v52 = vmul.f32 %v32, %v35
  %vm53 = vcmask 261120
  %v54 = vsel %vm53, %v37, 0.0
  %55 = vadd.xlane.f32.xlu0 %v54
  %v56 = vpop.xlane.xlu0 %55
  %vm57 = vcmask 257024
  %v58 = vsel %vm57, %v38, 0.0
  %59 = vadd.xlane.f32.xlu0 %v58
  %v60 = vpop.xlane.xlu0 %59
  %v61 = vsel %vm53, %v39, 0.0
  %62 = vadd.xlane.f32.xlu0 %v61
  %v63 = vpop.xlane.xlu0 %62
  %v64 = vsel %vm57, %v40, 0.0
  %65 = vadd.xlane.f32.xlu0 %v64
  %v66 = vpop.xlane.xlu0 %65
  %v67 = vsel %vm53, %v41, 0.0
  %68 = vadd.xlane.f32.xlu0 %v67
  %v69 = vpop.xlane.xlu0 %68
  %v70 = vsel %vm57, %v42, 0.0
  %71 = vadd.xlane.f32.xlu0 %v70
  %v72 = vpop.xlane.xlu0 %71
  %v73 = vsel %vm53, %v43, 0.0
  %74 = vadd.xlane.f32.xlu0 %v73
  %v75 = vpop.xlane.xlu0 %74
  %v76 = vsel %vm57, %v44, 0.0
  %77 = vadd.xlane.f32.xlu0 %v76
  %v78 = vpop.xlane.xlu0 %77
  %v79 = vsel %vm53, %v45, 0.0
  %80 = vadd.xlane.f32.xlu0 %v79
  %v81 = vpop.xlane.xlu0 %80
  %v82 = vsel %vm57, %v46, 0.0
  %83 = vadd.xlane.f32.xlu0 %v82
  %v84 = vpop.xlane.xlu0 %83
  %v85 = vsel %vm53, %v47, 0.0
  %86 = vadd.xlane.f32.xlu0 %v85
  %v87 = vpop.xlane.xlu0 %86
  %v88 = vsel %vm57, %v48, 0.0
  %89 = vadd.xlane.f32.xlu0 %v88
  %v90 = vpop.xlane.xlu0 %89
  %v91 = vsel %vm53, %v49, 0.0
  %92 = vadd.xlane.f32.xlu0 %v91
  %v93 = vpop.xlane.xlu0 %92
  %v94 = vsel %vm57, %v50, 0.0
  %95 = vadd.xlane.f32.xlu0 %v94
  %v96 = vpop.xlane.xlu0 %95
  %v97 = vsel %vm53, %v51, 0.0
  %98 = vadd.xlane.f32.xlu0 %v97
  %v99 = vpop.xlane.xlu0 %98
  %v100 = vsel %vm57, %v52, 0.0
  %101 = vadd.xlane.f32.xlu0 %v100
  %v102 = vpop.xlane.xlu0 %101
  %v103 = vld [vmem:[%s2] sm:$0xff]
  %v104 = vld [vmem:[%s2 + $0x8] sm:$0xf]
  %v105 = vld [vmem:[%s2 + $0x10] sm:$0xff]
  %v106 = vld [vmem:[%s2 + $0x18] sm:$0xf]
  %v107 = vld [vmem:[%s2 + $0x20] sm:$0xff]
  %v108 = vld [vmem:[%s2 + $0x28] sm:$0xf]
  %v109 = vld [vmem:[%s2 + $0x30] sm:$0xff]
  %v110 = vld [vmem:[%s2 + $0x38] sm:$0xf]
  %v111 = vld [vmem:[%s2 + $0x40] sm:$0xff]
  %v112 = vld [vmem:[%s2 + $0x48] sm:$0xf]
  %v113 = vld [vmem:[%s2 + $0x50] sm:$0xff]
  %v114 = vld [vmem:[%s2 + $0x58] sm:$0xf]
  %v115 = vld [vmem:[%s2 + $0x60] sm:$0xff]
  %v116 = vld [vmem:[%s2 + $0x68] sm:$0xf]
  %v117 = vld [vmem:[%s2 + $0x70] sm:$0xff]
  %v118 = vld [vmem:[%s2 + $0x78] sm:$0xf]
  %vm119 = vcmp.gt.f32.partialorder %v103, 0.0
  %vm120 = vcmp.gt.f32.partialorder %v104, 0.0
  %vm121 = vcmp.gt.f32.partialorder %v105, 0.0
  %vm122 = vcmp.gt.f32.partialorder %v106, 0.0
  %vm123 = vcmp.gt.f32.partialorder %v107, 0.0
  %vm124 = vcmp.gt.f32.partialorder %v108, 0.0
  %vm125 = vcmp.gt.f32.partialorder %v109, 0.0
  %vm126 = vcmp.gt.f32.partialorder %v110, 0.0
  %vm127 = vcmp.gt.f32.partialorder %v111, 0.0
  %vm128 = vcmp.gt.f32.partialorder %v112, 0.0
  %vm129 = vcmp.gt.f32.partialorder %v113, 0.0
  %vm130 = vcmp.gt.f32.partialorder %v114, 0.0
  %vm131 = vcmp.gt.f32.partialorder %v115, 0.0
  %vm132 = vcmp.gt.f32.partialorder %v116, 0.0
  %vm133 = vcmp.gt.f32.partialorder %v117, 0.0
  %vm134 = vcmp.gt.f32.partialorder %v118, 0.0
  %v135 = vsel %vm119, %v56, -10000.0
  %v136 = vsel %vm120, %v60, -10000.0
  %v137 = vsel %vm121, %v63, -10000.0
  %v138 = vsel %vm122, %v66, -10000.0
  %v139 = vsel %vm123, %v69, -10000.0
  %v140 = vsel %vm124, %v72, -10000.0
  %v141 = vsel %vm125, %v75, -10000.0
  %v142 = vsel %vm126, %v78, -10000.0
  %v143 = vsel %vm127, %v81, -10000.0
  %v144 = vsel %vm128, %v84, -10000.0
  %v145 = vsel %vm129, %v87, -10000.0
  %v146 = vsel %vm130, %v90, -10000.0
  %v147 = vsel %vm131, %v93, -10000.0
  %v148 = vsel %vm132, %v96, -10000.0
  %v149 = vsel %vm133, %v99, -10000.0
  %v150 = vsel %vm134, %v102, -10000.0
  %v151 = vrcp.pop 0.1
  %v152 = vmul.f32 0.1, %v151
  %v153 = vsub.f32 1.0, %v152
  %v154 = vmul.f32 %v151, %v153
  %v155 = vadd.f32 %v151, %v154
  %vm156 = vweird.f32 %v151
  %v157 = vsel %vm156, %v151, %v155
  %v158 = vmul.f32 %v135, %v157
  %v159 = vmul.f32 %v136, %v157
  %v160 = vmul.f32 %v137, %v157
  %v161 = vmul.f32 %v138, %v157
  %v162 = vmul.f32 %v139, %v157
  %v163 = vmul.f32 %v140, %v157
  %v164 = vmul.f32 %v141, %v157
  %v165 = vmul.f32 %v142, %v157
  %v166 = vmul.f32 %v143, %v157
  %v167 = vmul.f32 %v144, %v157
  %v168 = vmul.f32 %v145, %v157
  %v169 = vmul.f32 %v146, %v157
  %v170 = vmul.f32 %v147, %v157
  %v171 = vmul.f32 %v148, %v157
  %v172 = vmul.f32 %v149, %v157
  %v173 = vmul.f32 %v150, %v157
  %vm174 = vcmask 7168
  %v175 = vsel %vm174, %v158, -inf
  %vm176 = vcmask 3072
  %v177 = vsel %vm176, %v159, -inf
  %v178 = vmax.f32 %v175, %v177
  %v179 = vrot.slane %v178, 4
  %v180 = vmax.f32 %v178, %v179
  %v181 = vrot.slane %v180, 2
  %v182 = vmax.f32 %v180, %v181
  %v183 = vrot.slane %v182, 1
  %v184 = vmax.f32 %v182, %v183
  %v185 = vsel %vm174, %v160, -inf
  %v186 = vsel %vm176, %v161, -inf
  %v187 = vmax.f32 %v185, %v186
  %v188 = vrot.slane %v187, 4
  %v189 = vmax.f32 %v187, %v188
  %v190 = vrot.slane %v189, 2
  %v191 = vmax.f32 %v189, %v190
  %v192 = vrot.slane %v191, 1
  %v193 = vmax.f32 %v191, %v192
  %v194 = vsel %vm174, %v162, -inf
  %v195 = vsel %vm176, %v163, -inf
  %v196 = vmax.f32 %v194, %v195
  %v197 = vrot.slane %v196, 4
  %v198 = vmax.f32 %v196, %v197
  %v199 = vrot.slane %v198, 2
  %v200 = vmax.f32 %v198, %v199
  %v201 = vrot.slane %v200, 1
  %v202 = vmax.f32 %v200, %v201
  %v203 = vsel %vm174, %v164, -inf
  %v204 = vsel %vm176, %v165, -inf
  %v205 = vmax.f32 %v203, %v204
  %v206 = vrot.slane %v205, 4
  %v207 = vmax.f32 %v205, %v206
  %v208 = vrot.slane %v207, 2
  %v209 = vmax.f32 %v207, %v208
  %v210 = vrot.slane %v209, 1
  %v211 = vmax.f32 %v209, %v210
  %v212 = vsel %vm174, %v166, -inf
  %v213 = vsel %vm176, %v167, -inf
  %v214 = vmax.f32 %v212, %v213
  %v215 = vrot.slane %v214, 4
  %v216 = vmax.f32 %v214, %v215
  %v217 = vrot.slane %v216, 2
  %v218 = vmax.f32 %v216, %v217
  %v219 = vrot.slane %v218, 1
  %v220 = vmax.f32 %v218, %v219
  %v221 = vsel %vm174, %v168, -inf
  %v222 = vsel %vm176, %v169, -inf
  %v223 = vmax.f32 %v221, %v222
  %v224 = vrot.slane %v223, 4
  %v225 = vmax.f32 %v223, %v224
  %v226 = vrot.slane %v225, 2
  %v227 = vmax.f32 %v225, %v226
  %v228 = vrot.slane %v227, 1
  %v229 = vmax.f32 %v227, %v228
  %v230 = vsel %vm174, %v170, -inf
  %v231 = vsel %vm176, %v171, -inf
  %v232 = vmax.f32 %v230, %v231
  %v233 = vrot.slane %v232, 4
  %v234 = vmax.f32 %v232, %v233
  %v235 = vrot.slane %v234, 2
  %v236 = vmax.f32 %v234, %v235
  %v237 = vrot.slane %v236, 1
  %v238 = vmax.f32 %v236, %v237
  %v239 = vsel %vm174, %v172, -inf
  %v240 = vsel %vm176, %v173, -inf
  %v241 = vmax.f32 %v239, %v240
  %v242 = vrot.slane %v241, 4
  %v243 = vmax.f32 %v241, %v242
  %v244 = vrot.slane %v243, 2
  %v245 = vmax.f32 %v243, %v244
  %v246 = vrot.slane %v245, 1
  %v247 = vmax.f32 %v245, %v246
  %v248 = vsub.f32 %v158, %v184
  %v249 = vsub.f32 %v159, %v184
  %v250 = vsub.f32 %v160, %v193
  %v251 = vsub.f32 %v161, %v193
  %v252 = vsub.f32 %v162, %v202
  %v253 = vsub.f32 %v163, %v202
  %v254 = vsub.f32 %v164, %v211
  %v255 = vsub.f32 %v165, %v211
  %v256 = vsub.f32 %v166, %v220
  %v257 = vsub.f32 %v167, %v220
  %v258 = vsub.f32 %v168, %v229
  %v259 = vsub.f32 %v169, %v229
  %v260 = vsub.f32 %v170, %v238
  %v261 = vsub.f32 %v171, %v238
  %v262 = vsub.f32 %v172, %v247
  %v263 = vsub.f32 %v173, %v247
  %v264 = vmul.f32 %v248, 1.442695
  %v265 = vpow.pop %v264
  %v266 = vmul.f32 %v249, 1.442695
  %v267 = vpow.pop %v266
  %v268 = vmul.f32 %v250, 1.442695
  %v269 = vpow.pop %v268
  %v270 = vmul.f32 %v251, 1.442695
  %v271 = vpow.pop %v270
  %v272 = vmul.f32 %v252, 1.442695
  %v273 = vpow.pop %v272
  %v274 = vmul.f32 %v253, 1.442695
  %v275 = vpow.pop %v274
  %v276 = vmul.f32 %v254, 1.442695
  %v277 = vpow.pop %v276
  %v278 = vmul.f32 %v255, 1.442695
  %v279 = vpow.pop %v278
  %v280 = vmul.f32 %v256, 1.442695
  %v281 = vpow.pop %v280
  %v282 = vmul.f32 %v257, 1.442695
  %v283 = vpow.pop %v282
  %v284 = vmul.f32 %v258, 1.442695
  %v285 = vpow.pop %v284
  %v286 = vmul.f32 %v259, 1.442695
  %v287 = vpow.pop %v286
  %v288 = vmul.f32 %v260, 1.442695
  %v289 = vpow.pop %v288
  %v290 = vmul.f32 %v261, 1.442695
  %v291 = vpow.pop %v290
  %v292 = vmul.f32 %v262, 1.442695
  %v293 = vpow.pop %v292
  %v294 = vmul.f32 %v263, 1.442695
  %v295 = vpow.pop %v294
  %v296 = vsel %vm174, %v265, 0.0
  %v297 = vsel %vm176, %v267, 0.0
  %v298 = vadd.f32 %v296, %v297
  %v299 = vrot.slane %v298, 4
  %v300 = vadd.f32 %v298, %v299
  %v301 = vrot.slane %v300, 2
  %v302 = vadd.f32 %v300, %v301
  %v303 = vrot.slane %v302, 1
  %v304 = vadd.f32 %v302, %v303
  %v305 = vsel %vm174, %v269, 0.0
  %v306 = vsel %vm176, %v271, 0.0
  %v307 = vadd.f32 %v305, %v306
  %v308 = vrot.slane %v307, 4
  %v309 = vadd.f32 %v307, %v308
  %v310 = vrot.slane %v309, 2
  %v311 = vadd.f32 %v309, %v310
  %v312 = vrot.slane %v311, 1
  %v313 = vadd.f32 %v311, %v312
  %v314 = vsel %vm174, %v273, 0.0
  %v315 = vsel %vm176, %v275, 0.0
  %v316 = vadd.f32 %v314, %v315
  %v317 = vrot.slane %v316, 4
  %v318 = vadd.f32 %v316, %v317
  %v319 = vrot.slane %v318, 2
  %v320 = vadd.f32 %v318, %v319
  %v321 = vrot.slane %v320, 1
  %v322 = vadd.f32 %v320, %v321
  %v323 = vsel %vm174, %v277, 0.0
  %v324 = vsel %vm176, %v279, 0.0
  %v325 = vadd.f32 %v323, %v324
  %v326 = vrot.slane %v325, 4
  %v327 = vadd.f32 %v325, %v326
  %v328 = vrot.slane %v327, 2
  %v329 = vadd.f32 %v327, %v328
  %v330 = vrot.slane %v329, 1
  %v331 = vadd.f32 %v329, %v330
  %v332 = vsel %vm174, %v281, 0.0
  %v333 = vsel %vm176, %v283, 0.0
  %v334 = vadd.f32 %v332, %v333
  %v335 = vrot.slane %v334, 4
  %v336 = vadd.f32 %v334, %v335
  %v337 = vrot.slane %v336, 2
  %v338 = vadd.f32 %v336, %v337
  %v339 = vrot.slane %v338, 1
  %v340 = vadd.f32 %v338, %v339
  %v341 = vsel %vm174, %v285, 0.0
  %v342 = vsel %vm176, %v287, 0.0
  %v343 = vadd.f32 %v341, %v342
  %v344 = vrot.slane %v343, 4
  %v345 = vadd.f32 %v343, %v344
  %v346 = vrot.slane %v345, 2
  %v347 = vadd.f32 %v345, %v346
  %v348 = vrot.slane %v347, 1
  %v349 = vadd.f32 %v347, %v348
  %v350 = vsel %vm174, %v289, 0.0
  %v351 = vsel %vm176, %v291, 0.0
  %v352 = vadd.f32 %v350, %v351
  %v353 = vrot.slane %v352, 4
  %v354 = vadd.f32 %v352, %v353
  %v355 = vrot.slane %v354, 2
  %v356 = vadd.f32 %v354, %v355
  %v357 = vrot.slane %v356, 1
  %v358 = vadd.f32 %v356, %v357
  %v359 = vsel %vm174, %v293, 0.0
  %v360 = vsel %vm176, %v295, 0.0
  %v361 = vadd.f32 %v359, %v360
  %v362 = vrot.slane %v361, 4
  %v363 = vadd.f32 %v361, %v362
  %v364 = vrot.slane %v363, 2
  %v365 = vadd.f32 %v363, %v364
  %v366 = vrot.slane %v365, 1
  %v367 = vadd.f32 %v365, %v366
  %v368 = vrcp.pop %v304
  %v369 = vrcp.pop %v313
  %v370 = vrcp.pop %v322
  %v371 = vrcp.pop %v331
  %v372 = vrcp.pop %v340
  %v373 = vrcp.pop %v349
  %v374 = vrcp.pop %v358
  %v375 = vrcp.pop %v367
  %v376 = vmul.f32 %v265, %v368
  %v377 = vmul.f32 %v267, %v368
  %v378 = vmul.f32 %v269, %v369
  %v379 = vmul.f32 %v271, %v369
  %v380 = vmul.f32 %v273, %v370
  %v381 = vmul.f32 %v275, %v370
  %v382 = vmul.f32 %v277, %v371
  %v383 = vmul.f32 %v279, %v371
  %v384 = vmul.f32 %v281, %v372
  %v385 = vmul.f32 %v283, %v372
  %v386 = vmul.f32 %v285, %v373
  %v387 = vmul.f32 %v287, %v373
  %v388 = vmul.f32 %v289, %v374
  %v389 = vmul.f32 %v291, %v374
  %v390 = vmul.f32 %v293, %v375
  %v391 = vmul.f32 %v295, %v375
  %v392 = vld [vmem:[%s3] sm:$0xff]
  %v393 = vld [vmem:[%s3 + $0x8] sm:$0xf]
  %v394 = vld [vmem:[%s3 + $0x10] sm:$0xff]
  %v395 = vld [vmem:[%s3 + $0x18] sm:$0xf]
  %v396 = vld [vmem:[%s3 + $0x20] sm:$0xff]
  %v397 = vld [vmem:[%s3 + $0x28] sm:$0xf]
  %v398 = vld [vmem:[%s3 + $0x30] sm:$0xff]
  %v399 = vld [vmem:[%s3 + $0x38] sm:$0xf]
  %v400 = vld [vmem:[%s3 + $0x40] sm:$0xff]
  %v401 = vld [vmem:[%s3 + $0x48] sm:$0xf]
  %v402 = vld [vmem:[%s3 + $0x50] sm:$0xff]
  %v403 = vld [vmem:[%s3 + $0x58] sm:$0xf]
  %v404 = vld [vmem:[%s3 + $0x60] sm:$0xff]
  %v405 = vld [vmem:[%s3 + $0x68] sm:$0xf]
  %v406 = vld [vmem:[%s3 + $0x70] sm:$0xff]
  %v407 = vld [vmem:[%s3 + $0x78] sm:$0xf]
  %409 = vset.pattern.permute.xlu0 0
  %410 = vperm.xlu0 %409, %v376
  %v411 = vpop.permute.xlu0 %410
  %414 = vset.pattern.permute.xlu0 0
  %415 = vperm.xlu0 %414, %v377
  %v416 = vpop.permute.xlu0 %415
  %419 = vset.pattern.permute.xlu0 0
  %420 = vperm.xlu0 %419, %v378
  %v421 = vpop.permute.xlu0 %420
  %424 = vset.pattern.permute.xlu0 0
  %425 = vperm.xlu0 %424, %v379
  %v426 = vpop.permute.xlu0 %425
  %429 = vset.pattern.permute.xlu0 0
  %430 = vperm.xlu0 %429, %v380
  %v431 = vpop.permute.xlu0 %430
  %434 = vset.pattern.permute.xlu0 0
  %435 = vperm.xlu0 %434, %v381
  %v436 = vpop.permute.xlu0 %435
  %439 = vset.pattern.permute.xlu0 0
  %440 = vperm.xlu0 %439, %v382
  %v441 = vpop.permute.xlu0 %440
  %444 = vset.pattern.permute.xlu0 0
  %445 = vperm.xlu0 %444, %v383
  %v446 = vpop.permute.xlu0 %445
  %449 = vset.pattern.permute.xlu0 0
  %450 = vperm.xlu0 %449, %v384
  %v451 = vpop.permute.xlu0 %450
  %454 = vset.pattern.permute.xlu0 0
  %455 = vperm.xlu0 %454, %v385
  %v456 = vpop.permute.xlu0 %455
  %459 = vset.pattern.permute.xlu0 0
  %460 = vperm.xlu0 %459, %v386
  %v461 = vpop.permute.xlu0 %460
  %464 = vset.pattern.permute.xlu0 0
  %465 = vperm.xlu0 %464, %v387
  %v466 = vpop.permute.xlu0 %465
  %469 = vset.pattern.permute.xlu0 0
  %470 = vperm.xlu0 %469, %v388
  %v471 = vpop.permute.xlu0 %470
  %474 = vset.pattern.permute.xlu0 0
  %475 = vperm.xlu0 %474, %v389
  %v476 = vpop.permute.xlu0 %475
  %479 = vset.pattern.permute.xlu0 0
  %480 = vperm.xlu0 %479, %v390
  %v481 = vpop.permute.xlu0 %480
  %484 = vset.pattern.permute.xlu0 0
  %485 = vperm.xlu0 %484, %v391
  %v486 = vpop.permute.xlu0 %485
  %v488 = vmul.f32 %v392, %v411
  %v489 = vmul.f32 %v393, %v416
  %v490 = vmul.f32 %v394, %v421
  %v491 = vmul.f32 %v395, %v426
  %v492 = vmul.f32 %v396, %v431
  %v493 = vmul.f32 %v397, %v436
  %v494 = vmul.f32 %v398, %v441
  %v495 = vmul.f32 %v399, %v446
  %v496 = vmul.f32 %v400, %v451
  %v497 = vmul.f32 %v401, %v456
  %v498 = vmul.f32 %v402, %v461
  %v499 = vmul.f32 %v403, %v466
  %v500 = vmul.f32 %v404, %v471
  %v501 = vmul.f32 %v405, %v476
  %v502 = vmul.f32 %v406, %v481
  %v503 = vmul.f32 %v407, %v486
  %vm504 = vcmask 1043456
  %v505 = vsel %vm504, %v489, 0.0
  %v506 = vadd.f32 %v488, %v505
  %v507 = vrot.slane %v506, 4
  %v508 = vadd.f32 %v506, %v507
  %v509 = vrot.slane %v508, 2
  %v510 = vadd.f32 %v508, %v509
  %v511 = vrot.slane %v510, 1
  %v512 = vadd.f32 %v510, %v511
  %v513 = vsel %vm504, %v491, 0.0
  %v514 = vadd.f32 %v490, %v513
  %v515 = vrot.slane %v514, 4
  %v516 = vadd.f32 %v514, %v515
  %v517 = vrot.slane %v516, 2
  %v518 = vadd.f32 %v516, %v517
  %v519 = vrot.slane %v518, 1
  %v520 = vadd.f32 %v518, %v519
  %v521 = vsel %vm504, %v493, 0.0
  %v522 = vadd.f32 %v492, %v521
  %v523 = vrot.slane %v522, 4
  %v524 = vadd.f32 %v522, %v523
  %v525 = vrot.slane %v524, 2
  %v526 = vadd.f32 %v524, %v525
  %v527 = vrot.slane %v526, 1
  %v528 = vadd.f32 %v526, %v527
  %v529 = vsel %vm504, %v495, 0.0
  %v530 = vadd.f32 %v494, %v529
  %v531 = vrot.slane %v530, 4
  %v532 = vadd.f32 %v530, %v531
  %v533 = vrot.slane %v532, 2
  %v534 = vadd.f32 %v532, %v533
  %v535 = vrot.slane %v534, 1
  %v536 = vadd.f32 %v534, %v535
  %v537 = vsel %vm504, %v497, 0.0
  %v538 = vadd.f32 %v496, %v537
  %v539 = vrot.slane %v538, 4
  %v540 = vadd.f32 %v538, %v539
  %v541 = vrot.slane %v540, 2
  %v542 = vadd.f32 %v540, %v541
  %v543 = vrot.slane %v542, 1
  %v544 = vadd.f32 %v542, %v543
  %v545 = vsel %vm504, %v499, 0.0
  %v546 = vadd.f32 %v498, %v545
  %v547 = vrot.slane %v546, 4
  %v548 = vadd.f32 %v546, %v547
  %v549 = vrot.slane %v548, 2
  %v550 = vadd.f32 %v548, %v549
  %v551 = vrot.slane %v550, 1
  %v552 = vadd.f32 %v550, %v551
  %v553 = vsel %vm504, %v501, 0.0
  %v554 = vadd.f32 %v500, %v553
  %v555 = vrot.slane %v554, 4
  %v556 = vadd.f32 %v554, %v555
  %v557 = vrot.slane %v556, 2
  %v558 = vadd.f32 %v556, %v557
  %v559 = vrot.slane %v558, 1
  %v560 = vadd.f32 %v558, %v559
  %v561 = vsel %vm504, %v503, 0.0
  %v562 = vadd.f32 %v502, %v561
  %v563 = vrot.slane %v562, 4
  %v564 = vadd.f32 %v562, %v563
  %v565 = vrot.slane %v564, 2
  %v566 = vadd.f32 %v564, %v565
  %v567 = vrot.slane %v566, 1
  %v568 = vadd.f32 %v566, %v567
  %v569 = vmul.f32 %v512, %v512
  %v570 = vmul.f32 %v520, %v520
  %v571 = vmul.f32 %v528, %v528
  %v572 = vmul.f32 %v536, %v536
  %v573 = vmul.f32 %v544, %v544
  %v574 = vmul.f32 %v552, %v552
  %v575 = vmul.f32 %v560, %v560
  %v576 = vmul.f32 %v568, %v568
  %vm585 = vcmask 1041409
  %v586 = vsel %vm585, %v570, %v569
  %vm587 = vcmask 1042434
  %v588 = vsel %vm587, %v571, %v586
  %vm589 = vcmask 1043459
  %v590 = vsel %vm589, %v572, %v588
  %vm591 = vcmask 1044484
  %v592 = vsel %vm591, %v573, %v590
  %vm593 = vcmask 1045509
  %v594 = vsel %vm593, %v574, %v592
  %vm595 = vcmask 1046534
  %v596 = vsel %vm595, %v575, %v594
  %vm597 = vcmask 1047559
  %v598 = vsel %vm597, %v576, %v596
  %600 = vadd.xlane.f32.xlu0 %v598
  %v601 = vpop.xlane.xlu0 %600
  %v602 = vrsqrt.pop %v601
  %v603 = vmul.f32 %v602, %v601
  %v604 = vmul.f32 %v603, %v602
  %v605 = vmul.f32 0.5, %v604
  %v606 = vsub.f32 1.5, %v605
  %v607 = vmul.f32 %v602, %v606
  %v608 = vmul.f32 %v601, %v607
  %vm609 = vcmp.eq.f32.partialorder %v601, inf
  %v610 = vsel %vm609, %v601, %v608
  %vm611 = vcmp.eq.f32.partialorder %v601, 0.0
  %v612 = vand.u32 %v601, 2147483648
  %v613 = vsel %vm611, %v612, %v610
  %v614 = vadd.f32 %v613, 1e-08
  %v615 = vrcp.pop %v614
  %v617 = vrot.slane %v615, 1
  %v618 = vrot.slane %v615, 2
  %v619 = vrot.slane %v615, 3
  %v620 = vrot.slane %v615, 4
  %v621 = vrot.slane %v615, 5
  %v622 = vrot.slane %v615, 6
  %v623 = vrot.slane %v615, 7
  %v632 = vmul.f32 %v512, %v615
  %v633 = vmul.f32 %v520, %v617
  %v634 = vmul.f32 %v528, %v618
  %v635 = vmul.f32 %v536, %v619
  %v636 = vmul.f32 %v544, %v620
  %v637 = vmul.f32 %v552, %v621
  %v638 = vmul.f32 %v560, %v622
  %v639 = vmul.f32 %v568, %v623
  %v648 = vrot.slane %v633, 7
  %v649 = vsel %vm585, %v648, %v632
  %v650 = vrot.slane %v634, 6
  %v651 = vsel %vm587, %v650, %v649
  %v652 = vrot.slane %v635, 5
  %v653 = vsel %vm589, %v652, %v651
  %v654 = vrot.slane %v636, 4
  %v655 = vsel %vm591, %v654, %v653
  %v656 = vrot.slane %v637, 3
  %v657 = vsel %vm593, %v656, %v655
  %v658 = vrot.slane %v638, 2
  %v659 = vsel %vm595, %v658, %v657
  %v660 = vrot.slane %v639, 1
  %v661 = vsel %vm597, %v660, %v659
  %663 = vst [vmem:[%s4] sm:$0xff] %v661
  // Predicated region
  $region18: #{detecting_region.4} parent=0 // pred_check
    _
  $region19: #{detecting_region.4} parent=0 // pred_check_branch
    %665 = sbr.rel (0) target = $region21
  $region20: #{detecting_region.4} parent=0 // pred_region
    _
  $region21: #{detecting_region.4} parent=0 // pred_fallthru
    _
  // Predicated region
  $region22: #{detecting_region.4} parent=0 // pred_check
    _
  $region23: #{detecting_region.4} parent=0 // pred_check_branch
    %667 = sbr.rel (0) target = $region25
  $region24: #{detecting_region.4} parent=0 // pred_region
    _
  $region25: #{detecting_region.4} parent=0 // pred_fallthru
    _

// kernel: detecting_region.5
$region0: #{detecting_region.5}
  #allocation0 [shape = 'u32[]', space=smem, size = 0x4, offset = 0x4, fixed_abs, tag = 'smem constant byte address 0x4 - core index']
  #allocation1 [shape = 'u32[72,128]{1,0:T(1,128)}', space=vmem, size = 0x9000, scoped, tag = 'internal scratch']
  %s0 = inlined_call_operand.vmem [shape: f32[128,32], index: 0, kind: input, shape index: {}]
  %s1 = inlined_call_operand.vmem [shape: f32[128,1], index: 1, kind: input, shape index: {}]
  %s2 = inlined_call_operand.vmem [shape: f32[32,128], index: 2, kind: input, shape index: {}]
  %s3 = inlined_call_operand.vmem [shape: f32[8,128], index: 3, kind: output, shape index: {}]
  %s4 = sld [smem:[#allocation0]]
  $region22: #{detecting_region.5} parent=0
    _
  %s6 = ssub.s32 1, %s4
  %s7 = scalar_select 0, %s6, %s4
  // Predicated region
  $region2: #{detecting_region.5} parent=0 // pred_check
    _
  $region3: #{detecting_region.5} parent=0 // pred_check_branch
    %9 = sbr.rel (0) target = $region5
  $region4: #{detecting_region.5} parent=0 // pred_region
    _
  $region5: #{detecting_region.5} parent=0 // pred_fallthru
    _
  // Predicated region
  $region6: #{detecting_region.5} parent=0 // pred_check
    _
  $region7: #{detecting_region.5} parent=0 // pred_check_branch
    %11 = sbr.rel (0) target = $region9
  $region8: #{detecting_region.5} parent=0 // pred_region
    _
  $region9: #{detecting_region.5} parent=0 // pred_fallthru
    _
  // Predicated region
  $region10: #{detecting_region.5} parent=0 // pred_check
    _
  $region11: #{detecting_region.5} parent=0 // pred_check_branch
    %13 = sbr.rel (0) target = $region13
  $region12: #{detecting_region.5} parent=0 // pred_region
    _
  $region13: #{detecting_region.5} parent=0 // pred_fallthru
    _
  %v14 = vld [vmem:[%s0] sm:$0xff]
  %v15 = vld [vmem:[%s0 + $0x8] sm:$0xff]
  %v16 = vld [vmem:[%s0 + $0x10] sm:$0xff]
  %v17 = vld [vmem:[%s0 + $0x18] sm:$0xff]
  %v18 = vld [vmem:[%s0 + $0x20] sm:$0xff]
  %v19 = vld [vmem:[%s0 + $0x28] sm:$0xff]
  %v20 = vld [vmem:[%s0 + $0x30] sm:$0xff]
  %v21 = vld [vmem:[%s0 + $0x38] sm:$0xff]
  %v22 = vld [vmem:[%s0 + $0x40] sm:$0xff]
  %v23 = vld [vmem:[%s0 + $0x48] sm:$0xff]
  %v24 = vld [vmem:[%s0 + $0x50] sm:$0xff]
  %v25 = vld [vmem:[%s0 + $0x58] sm:$0xff]
  %v26 = vld [vmem:[%s0 + $0x60] sm:$0xff]
  %v27 = vld [vmem:[%s0 + $0x68] sm:$0xff]
  %v28 = vld [vmem:[%s0 + $0x70] sm:$0xff]
  %v29 = vld [vmem:[%s0 + $0x78] sm:$0xff]
  %v30 = vmul.f32 %v14, %v14
  %v31 = vmul.f32 %v15, %v15
  %v32 = vmul.f32 %v16, %v16
  %v33 = vmul.f32 %v17, %v17
  %v34 = vmul.f32 %v18, %v18
  %v35 = vmul.f32 %v19, %v19
  %v36 = vmul.f32 %v20, %v20
  %v37 = vmul.f32 %v21, %v21
  %v38 = vmul.f32 %v22, %v22
  %v39 = vmul.f32 %v23, %v23
  %v40 = vmul.f32 %v24, %v24
  %v41 = vmul.f32 %v25, %v25
  %v42 = vmul.f32 %v26, %v26
  %v43 = vmul.f32 %v27, %v27
  %v44 = vmul.f32 %v28, %v28
  %v45 = vmul.f32 %v29, %v29
  %vm46 = vcmask 261120
  %v47 = vsel %vm46, %v30, 0.0
  %48 = vadd.xlane.f32.xlu0 %v47
  %v49 = vpop.xlane.xlu0 %48
  %v50 = vsel %vm46, %v31, 0.0
  %51 = vadd.xlane.f32.xlu0 %v50
  %v52 = vpop.xlane.xlu0 %51
  %v53 = vsel %vm46, %v32, 0.0
  %54 = vadd.xlane.f32.xlu0 %v53
  %v55 = vpop.xlane.xlu0 %54
  %v56 = vsel %vm46, %v33, 0.0
  %57 = vadd.xlane.f32.xlu0 %v56
  %v58 = vpop.xlane.xlu0 %57
  %v59 = vsel %vm46, %v34, 0.0
  %60 = vadd.xlane.f32.xlu0 %v59
  %v61 = vpop.xlane.xlu0 %60
  %v62 = vsel %vm46, %v35, 0.0
  %63 = vadd.xlane.f32.xlu0 %v62
  %v64 = vpop.xlane.xlu0 %63
  %v65 = vsel %vm46, %v36, 0.0
  %66 = vadd.xlane.f32.xlu0 %v65
  %v67 = vpop.xlane.xlu0 %66
  %v68 = vsel %vm46, %v37, 0.0
  %69 = vadd.xlane.f32.xlu0 %v68
  %v70 = vpop.xlane.xlu0 %69
  %v71 = vsel %vm46, %v38, 0.0
  %72 = vadd.xlane.f32.xlu0 %v71
  %v73 = vpop.xlane.xlu0 %72
  %v74 = vsel %vm46, %v39, 0.0
  %75 = vadd.xlane.f32.xlu0 %v74
  %v76 = vpop.xlane.xlu0 %75
  %v77 = vsel %vm46, %v40, 0.0
  %78 = vadd.xlane.f32.xlu0 %v77
  %v79 = vpop.xlane.xlu0 %78
  %v80 = vsel %vm46, %v41, 0.0
  %81 = vadd.xlane.f32.xlu0 %v80
  %v82 = vpop.xlane.xlu0 %81
  %v83 = vsel %vm46, %v42, 0.0
  %84 = vadd.xlane.f32.xlu0 %v83
  %v85 = vpop.xlane.xlu0 %84
  %v86 = vsel %vm46, %v43, 0.0
  %87 = vadd.xlane.f32.xlu0 %v86
  %v88 = vpop.xlane.xlu0 %87
  %v89 = vsel %vm46, %v44, 0.0
  %90 = vadd.xlane.f32.xlu0 %v89
  %v91 = vpop.xlane.xlu0 %90
  %v92 = vsel %vm46, %v45, 0.0
  %93 = vadd.xlane.f32.xlu0 %v92
  %v94 = vpop.xlane.xlu0 %93
  %v95 = vrsqrt.pop %v49
  %v96 = vmul.f32 %v95, %v49
  %v97 = vmul.f32 %v96, %v95
  %v98 = vmul.f32 0.5, %v97
  %v99 = vsub.f32 1.5, %v98
  %v100 = vmul.f32 %v95, %v99
  %v101 = vmul.f32 %v49, %v100
  %vm102 = vcmp.eq.f32.partialorder %v49, inf
  %v103 = vsel %vm102, %v49, %v101
  %vm104 = vcmp.eq.f32.partialorder %v49, 0.0
  %v105 = vand.u32 %v49, 2147483648
  %v106 = vsel %vm104, %v105, %v103
  %v107 = vrsqrt.pop %v52
  %v108 = vmul.f32 %v107, %v52
  %v109 = vmul.f32 %v108, %v107
  %v110 = vmul.f32 0.5, %v109
  %v111 = vsub.f32 1.5, %v110
  %v112 = vmul.f32 %v107, %v111
  %v113 = vmul.f32 %v52, %v112
  %vm114 = vcmp.eq.f32.partialorder %v52, inf
  %v115 = vsel %vm114, %v52, %v113
  %vm116 = vcmp.eq.f32.partialorder %v52, 0.0
  %v117 = vand.u32 %v52, 2147483648
  %v118 = vsel %vm116, %v117, %v115
  %v119 = vrsqrt.pop %v55
  %v120 = vmul.f32 %v119, %v55
  %v121 = vmul.f32 %v120, %v119
  %v122 = vmul.f32 0.5, %v121
  %v123 = vsub.f32 1.5, %v122
  %v124 = vmul.f32 %v119, %v123
  %v125 = vmul.f32 %v55, %v124
  %vm126 = vcmp.eq.f32.partialorder %v55, inf
  %v127 = vsel %vm126, %v55, %v125
  %vm128 = vcmp.eq.f32.partialorder %v55, 0.0
  %v129 = vand.u32 %v55, 2147483648
  %v130 = vsel %vm128, %v129, %v127
  %v131 = vrsqrt.pop %v58
  %v132 = vmul.f32 %v131, %v58
  %v133 = vmul.f32 %v132, %v131
  %v134 = vmul.f32 0.5, %v133
  %v135 = vsub.f32 1.5, %v134
  %v136 = vmul.f32 %v131, %v135
  %v137 = vmul.f32 %v58, %v136
  %vm138 = vcmp.eq.f32.partialorder %v58, inf
  %v139 = vsel %vm138, %v58, %v137
  %vm140 = vcmp.eq.f32.partialorder %v58, 0.0
  %v141 = vand.u32 %v58, 2147483648
  %v142 = vsel %vm140, %v141, %v139
  %v143 = vrsqrt.pop %v61
  %v144 = vmul.f32 %v143, %v61
  %v145 = vmul.f32 %v144, %v143
  %v146 = vmul.f32 0.5, %v145
  %v147 = vsub.f32 1.5, %v146
  %v148 = vmul.f32 %v143, %v147
  %v149 = vmul.f32 %v61, %v148
  %vm150 = vcmp.eq.f32.partialorder %v61, inf
  %v151 = vsel %vm150, %v61, %v149
  %vm152 = vcmp.eq.f32.partialorder %v61, 0.0
  %v153 = vand.u32 %v61, 2147483648
  %v154 = vsel %vm152, %v153, %v151
  %v155 = vrsqrt.pop %v64
  %v156 = vmul.f32 %v155, %v64
  %v157 = vmul.f32 %v156, %v155
  %v158 = vmul.f32 0.5, %v157
  %v159 = vsub.f32 1.5, %v158
  %v160 = vmul.f32 %v155, %v159
  %v161 = vmul.f32 %v64, %v160
  %vm162 = vcmp.eq.f32.partialorder %v64, inf
  %v163 = vsel %vm162, %v64, %v161
  %vm164 = vcmp.eq.f32.partialorder %v64, 0.0
  %v165 = vand.u32 %v64, 2147483648
  %v166 = vsel %vm164, %v165, %v163
  %v167 = vrsqrt.pop %v67
  %v168 = vmul.f32 %v167, %v67
  %v169 = vmul.f32 %v168, %v167
  %v170 = vmul.f32 0.5, %v169
  %v171 = vsub.f32 1.5, %v170
  %v172 = vmul.f32 %v167, %v171
  %v173 = vmul.f32 %v67, %v172
  %vm174 = vcmp.eq.f32.partialorder %v67, inf
  %v175 = vsel %vm174, %v67, %v173
  %vm176 = vcmp.eq.f32.partialorder %v67, 0.0
  %v177 = vand.u32 %v67, 2147483648
  %v178 = vsel %vm176, %v177, %v175
  %v179 = vrsqrt.pop %v70
  %v180 = vmul.f32 %v179, %v70
  %v181 = vmul.f32 %v180, %v179
  %v182 = vmul.f32 0.5, %v181
  %v183 = vsub.f32 1.5, %v182
  %v184 = vmul.f32 %v179, %v183
  %v185 = vmul.f32 %v70, %v184
  %vm186 = vcmp.eq.f32.partialorder %v70, inf
  %v187 = vsel %vm186, %v70, %v185
  %vm188 = vcmp.eq.f32.partialorder %v70, 0.0
  %v189 = vand.u32 %v70, 2147483648
  %v190 = vsel %vm188, %v189, %v187
  %v191 = vrsqrt.pop %v73
  %v192 = vmul.f32 %v191, %v73
  %v193 = vmul.f32 %v192, %v191
  %v194 = vmul.f32 0.5, %v193
  %v195 = vsub.f32 1.5, %v194
  %v196 = vmul.f32 %v191, %v195
  %v197 = vmul.f32 %v73, %v196
  %vm198 = vcmp.eq.f32.partialorder %v73, inf
  %v199 = vsel %vm198, %v73, %v197
  %vm200 = vcmp.eq.f32.partialorder %v73, 0.0
  %v201 = vand.u32 %v73, 2147483648
  %v202 = vsel %vm200, %v201, %v199
  %v203 = vrsqrt.pop %v76
  %v204 = vmul.f32 %v203, %v76
  %v205 = vmul.f32 %v204, %v203
  %v206 = vmul.f32 0.5, %v205
  %v207 = vsub.f32 1.5, %v206
  %v208 = vmul.f32 %v203, %v207
  %v209 = vmul.f32 %v76, %v208
  %vm210 = vcmp.eq.f32.partialorder %v76, inf
  %v211 = vsel %vm210, %v76, %v209
  %vm212 = vcmp.eq.f32.partialorder %v76, 0.0
  %v213 = vand.u32 %v76, 2147483648
  %v214 = vsel %vm212, %v213, %v211
  %v215 = vrsqrt.pop %v79
  %v216 = vmul.f32 %v215, %v79
  %v217 = vmul.f32 %v216, %v215
  %v218 = vmul.f32 0.5, %v217
  %v219 = vsub.f32 1.5, %v218
  %v220 = vmul.f32 %v215, %v219
  %v221 = vmul.f32 %v79, %v220
  %vm222 = vcmp.eq.f32.partialorder %v79, inf
  %v223 = vsel %vm222, %v79, %v221
  %vm224 = vcmp.eq.f32.partialorder %v79, 0.0
  %v225 = vand.u32 %v79, 2147483648
  %v226 = vsel %vm224, %v225, %v223
  %v227 = vrsqrt.pop %v82
  %v228 = vmul.f32 %v227, %v82
  %v229 = vmul.f32 %v228, %v227
  %v230 = vmul.f32 0.5, %v229
  %v231 = vsub.f32 1.5, %v230
  %v232 = vmul.f32 %v227, %v231
  %v233 = vmul.f32 %v82, %v232
  %vm234 = vcmp.eq.f32.partialorder %v82, inf
  %v235 = vsel %vm234, %v82, %v233
  %vm236 = vcmp.eq.f32.partialorder %v82, 0.0
  %v237 = vand.u32 %v82, 2147483648
  %v238 = vsel %vm236, %v237, %v235
  %v239 = vrsqrt.pop %v85
  %v240 = vmul.f32 %v239, %v85
  %v241 = vmul.f32 %v240, %v239
  %v242 = vmul.f32 0.5, %v241
  %v243 = vsub.f32 1.5, %v242
  %v244 = vmul.f32 %v239, %v243
  %v245 = vmul.f32 %v85, %v244
  %vm246 = vcmp.eq.f32.partialorder %v85, inf
  %v247 = vsel %vm246, %v85, %v245
  %vm248 = vcmp.eq.f32.partialorder %v85, 0.0
  %v249 = vand.u32 %v85, 2147483648
  %v250 = vsel %vm248, %v249, %v247
  %v251 = vrsqrt.pop %v88
  %v252 = vmul.f32 %v251, %v88
  %v253 = vmul.f32 %v252, %v251
  %v254 = vmul.f32 0.5, %v253
  %v255 = vsub.f32 1.5, %v254
  %v256 = vmul.f32 %v251, %v255
  %v257 = vmul.f32 %v88, %v256
  %vm258 = vcmp.eq.f32.partialorder %v88, inf
  %v259 = vsel %vm258, %v88, %v257
  %vm260 = vcmp.eq.f32.partialorder %v88, 0.0
  %v261 = vand.u32 %v88, 2147483648
  %v262 = vsel %vm260, %v261, %v259
  %v263 = vrsqrt.pop %v91
  %v264 = vmul.f32 %v263, %v91
  %v265 = vmul.f32 %v264, %v263
  %v266 = vmul.f32 0.5, %v265
  %v267 = vsub.f32 1.5, %v266
  %v268 = vmul.f32 %v263, %v267
  %v269 = vmul.f32 %v91, %v268
  %vm270 = vcmp.eq.f32.partialorder %v91, inf
  %v271 = vsel %vm270, %v91, %v269
  %vm272 = vcmp.eq.f32.partialorder %v91, 0.0
  %v273 = vand.u32 %v91, 2147483648
  %v274 = vsel %vm272, %v273, %v271
  %v275 = vrsqrt.pop %v94
  %v276 = vmul.f32 %v275, %v94
  %v277 = vmul.f32 %v276, %v275
  %v278 = vmul.f32 0.5, %v277
  %v279 = vsub.f32 1.5, %v278
  %v280 = vmul.f32 %v275, %v279
  %v281 = vmul.f32 %v94, %v280
  %vm282 = vcmp.eq.f32.partialorder %v94, inf
  %v283 = vsel %vm282, %v94, %v281
  %vm284 = vcmp.eq.f32.partialorder %v94, 0.0
  %v285 = vand.u32 %v94, 2147483648
  %v286 = vsel %vm284, %v285, %v283
  %v287 = vadd.f32 %v106, 1e-08
  %v288 = vadd.f32 %v118, 1e-08
  %v289 = vadd.f32 %v130, 1e-08
  %v290 = vadd.f32 %v142, 1e-08
  %v291 = vadd.f32 %v154, 1e-08
  %v292 = vadd.f32 %v166, 1e-08
  %v293 = vadd.f32 %v178, 1e-08
  %v294 = vadd.f32 %v190, 1e-08
  %v295 = vadd.f32 %v202, 1e-08
  %v296 = vadd.f32 %v214, 1e-08
  %v297 = vadd.f32 %v226, 1e-08
  %v298 = vadd.f32 %v238, 1e-08
  %v299 = vadd.f32 %v250, 1e-08
  %v300 = vadd.f32 %v262, 1e-08
  %v301 = vadd.f32 %v274, 1e-08
  %v302 = vadd.f32 %v286, 1e-08
  %v303 = vrcp.pop %v287
  %v304 = vrcp.pop %v288
  %v305 = vrcp.pop %v289
  %v306 = vrcp.pop %v290
  %v307 = vrcp.pop %v291
  %v308 = vrcp.pop %v292
  %v309 = vrcp.pop %v293
  %v310 = vrcp.pop %v294
  %v311 = vrcp.pop %v295
  %v312 = vrcp.pop %v296
  %v313 = vrcp.pop %v297
  %v314 = vrcp.pop %v298
  %v315 = vrcp.pop %v299
  %v316 = vrcp.pop %v300
  %v317 = vrcp.pop %v301
  %v318 = vrcp.pop %v302
  %v319 = vmul.f32 %v14, %v303
  %v320 = vmul.f32 %v15, %v304
  %v321 = vmul.f32 %v16, %v305
  %v322 = vmul.f32 %v17, %v306
  %v323 = vmul.f32 %v18, %v307
  %v324 = vmul.f32 %v19, %v308
  %v325 = vmul.f32 %v20, %v309
  %v326 = vmul.f32 %v21, %v310
  %v327 = vmul.f32 %v22, %v311
  %v328 = vmul.f32 %v23, %v312
  %v329 = vmul.f32 %v24, %v313
  %v330 = vmul.f32 %v25, %v314
  %v331 = vmul.f32 %v26, %v315
  %v332 = vmul.f32 %v27, %v316
  %v333 = vmul.f32 %v28, %v317
  %v334 = vmul.f32 %v29, %v318
  %v335 = vld [vmem:[%s2] sm:$0xff]
  %v336 = vld [vmem:[%s2 + $0x8] sm:$0xff]
  %v337 = vld [vmem:[%s2 + $0x10] sm:$0xff]
  %v338 = vld [vmem:[%s2 + $0x18] sm:$0xff]
  %v340 = vsel %vm46, %v319, 0
  %v343 = vsel %vm46, %v320, 0
  %v346 = vsel %vm46, %v321, 0
  %v349 = vsel %vm46, %v322, 0
  %v352 = vsel %vm46, %v323, 0
  %v355 = vsel %vm46, %v324, 0
  %v358 = vsel %vm46, %v325, 0
  %v361 = vsel %vm46, %v326, 0
  %v364 = vsel %vm46, %v327, 0
  %v367 = vsel %vm46, %v328, 0
  %v370 = vsel %vm46, %v329, 0
  %v373 = vsel %vm46, %v330, 0
  %v376 = vsel %vm46, %v331, 0
  %v379 = vsel %vm46, %v332, 0
  %v382 = vsel %vm46, %v333, 0
  %v385 = vsel %vm46, %v334, 0
  %387 = vmatpush.msra.mxu0 0.0
  %388 = vmatpush.msra.mxu0 0.0
  %389 = vmatpush.msra.mxu0 0.0
  %390 = vmatpush.msra.mxu0 0.0
  %391 = vmatpush.msra.mxu0 0.0
  %392 = vmatpush.msra.mxu0 0.0
  %393 = vmatpush.msra.mxu0 0.0
  %394 = vmatpush.msra.mxu0 0.0
  %395 = vmatpush.msra.mxu0 0.0
  %396 = vmatpush.msra.mxu0 0.0
  %397 = vmatpush.msra.mxu0 0.0
  %398 = vmatpush.msra.mxu0 0.0
  %399 = vmatpush.msra.mxu0 %v338
  %400 = vmatpush.msra.mxu0 %v337
  %401 = vmatpush.msra.mxu0 %v336
  %402 = vmatpush.msra.mxu0 %v335
  %403 = vmatmul.f32.gmra.mxu0 %v340
  %v404 = vpop.f32.mrf.mxu0
  %v405 = vadd.f32 0.0, %v404
  %406 = vmatmul.f32.gmra.mxu0 %v343
  %v407 = vpop.f32.mrf.mxu0
  %v408 = vadd.f32 0.0, %v407
  %409 = vmatmul.f32.gmra.mxu0 %v346
  %v410 = vpop.f32.mrf.mxu0
  %v411 = vadd.f32 0.0, %v410
  %412 = vmatmul.f32.gmra.mxu0 %v349
  %v413 = vpop.f32.mrf.mxu0
  %v414 = vadd.f32 0.0, %v413
  %415 = vmatmul.f32.gmra.mxu0 %v352
  %v416 = vpop.f32.mrf.mxu0
  %v417 = vadd.f32 0.0, %v416
  %418 = vmatmul.f32.gmra.mxu0 %v355
  %v419 = vpop.f32.mrf.mxu0
  %v420 = vadd.f32 0.0, %v419
  %421 = vmatmul.f32.gmra.mxu0 %v358
  %v422 = vpop.f32.mrf.mxu0
  %v423 = vadd.f32 0.0, %v422
  %424 = vmatmul.f32.gmra.mxu0 %v361
  %v425 = vpop.f32.mrf.mxu0
  %v426 = vadd.f32 0.0, %v425
  %427 = vmatmul.f32.gmra.mxu0 %v364
  %v428 = vpop.f32.mrf.mxu0
  %v429 = vadd.f32 0.0, %v428
  %430 = vmatmul.f32.gmra.mxu0 %v367
  %v431 = vpop.f32.mrf.mxu0
  %v432 = vadd.f32 0.0, %v431
  %433 = vmatmul.f32.gmra.mxu0 %v370
  %v434 = vpop.f32.mrf.mxu0
  %v435 = vadd.f32 0.0, %v434
  %436 = vmatmul.f32.gmra.mxu0 %v373
  %v437 = vpop.f32.mrf.mxu0
  %v438 = vadd.f32 0.0, %v437
  %439 = vmatmul.f32.gmra.mxu0 %v376
  %v440 = vpop.f32.mrf.mxu0
  %v441 = vadd.f32 0.0, %v440
  %442 = vmatmul.f32.gmra.mxu0 %v379
  %v443 = vpop.f32.mrf.mxu0
  %v444 = vadd.f32 0.0, %v443
  %445 = vmatmul.f32.gmra.mxu0 %v382
  %v446 = vpop.f32.mrf.mxu0
  %v447 = vadd.f32 0.0, %v446
  %448 = vmatmul.f32.gmra.mxu0 %v385
  %v449 = vpop.f32.mrf.mxu0
  %v450 = vadd.f32 0.0, %v449
  %451 = vdwg.mxu0
  %v452 = vld [vmem:[%s1] sm:$0xff]
  %v453 = vld [vmem:[%s1 + $0x8] sm:$0xff]
  %v454 = vld [vmem:[%s1 + $0x10] sm:$0xff]
  %v455 = vld [vmem:[%s1 + $0x18] sm:$0xff]
  %v456 = vld [vmem:[%s1 + $0x20] sm:$0xff]
  %v457 = vld [vmem:[%s1 + $0x28] sm:$0xff]
  %v458 = vld [vmem:[%s1 + $0x30] sm:$0xff]
  %v459 = vld [vmem:[%s1 + $0x38] sm:$0xff]
  %v460 = vld [vmem:[%s1 + $0x40] sm:$0xff]
  %v461 = vld [vmem:[%s1 + $0x48] sm:$0xff]
  %v462 = vld [vmem:[%s1 + $0x50] sm:$0xff]
  %v463 = vld [vmem:[%s1 + $0x58] sm:$0xff]
  %v464 = vld [vmem:[%s1 + $0x60] sm:$0xff]
  %v465 = vld [vmem:[%s1 + $0x68] sm:$0xff]
  %v466 = vld [vmem:[%s1 + $0x70] sm:$0xff]
  %v467 = vld [vmem:[%s1 + $0x78] sm:$0xff]
  %vm468 = vcmp.gt.f32.partialorder %v452, 0.0
  %vm469 = vcmp.gt.f32.partialorder %v453, 0.0
  %vm470 = vcmp.gt.f32.partialorder %v454, 0.0
  %vm471 = vcmp.gt.f32.partialorder %v455, 0.0
  %vm472 = vcmp.gt.f32.partialorder %v456, 0.0
  %vm473 = vcmp.gt.f32.partialorder %v457, 0.0
  %vm474 = vcmp.gt.f32.partialorder %v458, 0.0
  %vm475 = vcmp.gt.f32.partialorder %v459, 0.0
  %vm476 = vcmp.gt.f32.partialorder %v460, 0.0
  %vm477 = vcmp.gt.f32.partialorder %v461, 0.0
  %vm478 = vcmp.gt.f32.partialorder %v462, 0.0
  %vm479 = vcmp.gt.f32.partialorder %v463, 0.0
  %vm480 = vcmp.gt.f32.partialorder %v464, 0.0
  %vm481 = vcmp.gt.f32.partialorder %v465, 0.0
  %vm482 = vcmp.gt.f32.partialorder %v466, 0.0
  %vm483 = vcmp.gt.f32.partialorder %v467, 0.0
  %v484 = vsel %vm468, 1, 0
  %v485 = vsel %vm469, 1, 0
  %v486 = vsel %vm470, 1, 0
  %v487 = vsel %vm471, 1, 0
  %v488 = vsel %vm472, 1, 0
  %v489 = vsel %vm473, 1, 0
  %v490 = vsel %vm474, 1, 0
  %v491 = vsel %vm475, 1, 0
  %v492 = vsel %vm476, 1, 0
  %v493 = vsel %vm477, 1, 0
  %v494 = vsel %vm478, 1, 0
  %v495 = vsel %vm479, 1, 0
  %v496 = vsel %vm480, 1, 0
  %v497 = vsel %vm481, 1, 0
  %v498 = vsel %vm482, 1, 0
  %v499 = vsel %vm483, 1, 0
  %500 = vset.pattern.permute.xlu0 0
  %501 = vperm.xlu0 %500, %v484
  %v502 = vpop.permute.xlu0 %501
  %503 = vset.pattern.permute.xlu0 0
  %504 = vperm.xlu0 %503, %v485
  %v505 = vpop.permute.xlu0 %504
  %506 = vset.pattern.permute.xlu0 0
  %507 = vperm.xlu0 %506, %v486
  %v508 = vpop.permute.xlu0 %507
  %509 = vset.pattern.permute.xlu0 0
  %510 = vperm.xlu0 %509, %v487
  %v511 = vpop.permute.xlu0 %510
  %512 = vset.pattern.permute.xlu0 0
  %513 = vperm.xlu0 %512, %v488
  %v514 = vpop.permute.xlu0 %513
  %515 = vset.pattern.permute.xlu0 0
  %516 = vperm.xlu0 %515, %v489
  %v517 = vpop.permute.xlu0 %516
  %518 = vset.pattern.permute.xlu0 0
  %519 = vperm.xlu0 %518, %v490
  %v520 = vpop.permute.xlu0 %519
  %521 = vset.pattern.permute.xlu0 0
  %522 = vperm.xlu0 %521, %v491
  %v523 = vpop.permute.xlu0 %522
  %524 = vset.pattern.permute.xlu0 0
  %525 = vperm.xlu0 %524, %v492
  %v526 = vpop.permute.xlu0 %525
  %527 = vset.pattern.permute.xlu0 0
  %528 = vperm.xlu0 %527, %v493
  %v529 = vpop.permute.xlu0 %528
  %530 = vset.pattern.permute.xlu0 0
  %531 = vperm.xlu0 %530, %v494
  %v532 = vpop.permute.xlu0 %531
  %533 = vset.pattern.permute.xlu0 0
  %534 = vperm.xlu0 %533, %v495
  %v535 = vpop.permute.xlu0 %534
  %536 = vset.pattern.permute.xlu0 0
  %537 = vperm.xlu0 %536, %v496
  %v538 = vpop.permute.xlu0 %537
  %539 = vset.pattern.permute.xlu0 0
  %540 = vperm.xlu0 %539, %v497
  %v541 = vpop.permute.xlu0 %540
  %542 = vset.pattern.permute.xlu0 0
  %543 = vperm.xlu0 %542, %v498
  %v544 = vpop.permute.xlu0 %543
  %545 = vset.pattern.permute.xlu0 0
  %546 = vperm.xlu0 %545, %v499
  %v547 = vpop.permute.xlu0 %546
  %vm548 = vcmp.eq.s32.totalorder %v502, 1
  %vm549 = vcmp.eq.s32.totalorder %v505, 1
  %vm550 = vcmp.eq.s32.totalorder %v508, 1
  %vm551 = vcmp.eq.s32.totalorder %v511, 1
  %vm552 = vcmp.eq.s32.totalorder %v514, 1
  %vm553 = vcmp.eq.s32.totalorder %v517, 1
  %vm554 = vcmp.eq.s32.totalorder %v520, 1
  %vm555 = vcmp.eq.s32.totalorder %v523, 1
  %vm556 = vcmp.eq.s32.totalorder %v526, 1
  %vm557 = vcmp.eq.s32.totalorder %v529, 1
  %vm558 = vcmp.eq.s32.totalorder %v532, 1
  %vm559 = vcmp.eq.s32.totalorder %v535, 1
  %vm560 = vcmp.eq.s32.totalorder %v538, 1
  %vm561 = vcmp.eq.s32.totalorder %v541, 1
  %vm562 = vcmp.eq.s32.totalorder %v544, 1
  %vm563 = vcmp.eq.s32.totalorder %v547, 1
  %v564 = vsel %vm548, %v405, -1.0
  %v565 = vsel %vm549, %v408, -1.0
  %v566 = vsel %vm550, %v411, -1.0
  %v567 = vsel %vm551, %v414, -1.0
  %v568 = vsel %vm552, %v417, -1.0
  %v569 = vsel %vm553, %v420, -1.0
  %v570 = vsel %vm554, %v423, -1.0
  %v571 = vsel %vm555, %v426, -1.0
  %v572 = vsel %vm556, %v429, -1.0
  %v573 = vsel %vm557, %v432, -1.0
  %v574 = vsel %vm558, %v435, -1.0
  %v575 = vsel %vm559, %v438, -1.0
  %v576 = vsel %vm560, %v441, -1.0
  %v577 = vsel %vm561, %v444, -1.0
  %v578 = vsel %vm562, %v447, -1.0
  %v579 = vsel %vm563, %v450, -1.0
  %v580 = vmax.f32 %v564, %v565
  %v581 = vrot.slane %v580, 4
  %v582 = vmax.f32 %v580, %v581
  %v583 = vrot.slane %v582, 2
  %v584 = vmax.f32 %v582, %v583
  %v585 = vrot.slane %v584, 1
  %v586 = vmax.f32 %v584, %v585
  %v587 = vmax.f32 %v566, %v567
  %v588 = vrot.slane %v587, 4
  %v589 = vmax.f32 %v587, %v588
  %v590 = vrot.slane %v589, 2
  %v591 = vmax.f32 %v589, %v590
  %v592 = vrot.slane %v591, 1
  %v593 = vmax.f32 %v591, %v592
  %v594 = vmax.f32 %v568, %v569
  %v595 = vrot.slane %v594, 4
  %v596 = vmax.f32 %v594, %v595
  %v597 = vrot.slane %v596, 2
  %v598 = vmax.f32 %v596, %v597
  %v599 = vrot.slane %v598, 1
  %v600 = vmax.f32 %v598, %v599
  %v601 = vmax.f32 %v570, %v571
  %v602 = vrot.slane %v601, 4
  %v603 = vmax.f32 %v601, %v602
  %v604 = vrot.slane %v603, 2
  %v605 = vmax.f32 %v603, %v604
  %v606 = vrot.slane %v605, 1
  %v607 = vmax.f32 %v605, %v606
  %v608 = vmax.f32 %v572, %v573
  %v609 = vrot.slane %v608, 4
  %v610 = vmax.f32 %v608, %v609
  %v611 = vrot.slane %v610, 2
  %v612 = vmax.f32 %v610, %v611
  %v613 = vrot.slane %v612, 1
  %v614 = vmax.f32 %v612, %v613
  %v615 = vmax.f32 %v574, %v575
  %v616 = vrot.slane %v615, 4
  %v617 = vmax.f32 %v615, %v616
  %v618 = vrot.slane %v617, 2
  %v619 = vmax.f32 %v617, %v618
  %v620 = vrot.slane %v619, 1
  %v621 = vmax.f32 %v619, %v620
  %v622 = vmax.f32 %v576, %v577
  %v623 = vrot.slane %v622, 4
  %v624 = vmax.f32 %v622, %v623
  %v625 = vrot.slane %v624, 2
  %v626 = vmax.f32 %v624, %v625
  %v627 = vrot.slane %v626, 1
  %v628 = vmax.f32 %v626, %v627
  %v629 = vmax.f32 %v578, %v579
  %v630 = vrot.slane %v629, 4
  %v631 = vmax.f32 %v629, %v630
  %v632 = vrot.slane %v631, 2
  %v633 = vmax.f32 %v631, %v632
  %v634 = vrot.slane %v633, 1
  %v635 = vmax.f32 %v633, %v634
  %vm636 = vcmask 1040384
  %v637 = vsel %vm636, %v586, %v593
  %vm638 = vcmask 1041408
  %v639 = vsel %vm638, %v637, %v600
  %vm640 = vcmask 1042432
  %v641 = vsel %vm640, %v639, %v607
  %vm642 = vcmask 1043456
  %v643 = vsel %vm642, %v641, %v614
  %vm644 = vcmask 1044480
  %v645 = vsel %vm644, %v643, %v621
  %vm646 = vcmask 1045504
  %v647 = vsel %vm646, %v645, %v628
  %vm648 = vcmask 1046528
  %v649 = vsel %vm648, %v647, %v635
  %650 = vst [vmem:[%s3] sm:$0xff] %v649
  // Predicated region
  $region14: #{detecting_region.5} parent=0 // pred_check
    _
  $region15: #{detecting_region.5} parent=0 // pred_check_branch
    %652 = sbr.rel (0) target = $region17
  $region16: #{detecting_region.5} parent=0 // pred_region
    _
  $region17: #{detecting_region.5} parent=0 // pred_fallthru
    _
  // Predicated region
  $region18: #{detecting_region.5} parent=0 // pred_check
    _
  $region19: #{detecting_region.5} parent=0 // pred_check_branch
    %654 = sbr.rel (0) target = $region21
  $region20: #{detecting_region.5} parent=0 // pred_region
    _
  $region21: #{detecting_region.5} parent=0 // pred_fallthru
    _

</llo_original>
